<compile_context>
chip_gen: v6e
topology: v6e:2x2x1
jax: 0.10.0
libtpu: 0.0.40
codegen_flags: <defaults>
</compile_context>

<pallas_src>
import jax
import jax.numpy as jnp
from jax.experimental import pallas as pl
from jax.experimental.pallas import tpu as pltpu

HIDDEN = 512
N_HIDDEN = 7          # the seven 512x512 layers (l2..l8)
LANE = 128
SUBLANE = 8


def _round_up(x, m):
    return (x + m - 1) // m * m


def _mlp_kernel(x_ref, w_in_ref, w_hid_ref, w_out_ref, b_hid_ref, b_out_ref,
                o_ref, h_ref):
    """One grid step = one hidden layer; first/last layers fused at the ends."""
    l = pl.program_id(0)

    @pl.when(l == 0)
    def _():
        # Layer 1: (B, IN) @ (IN, 512) + b1, ReLU.
        y = jnp.dot(x_ref[...].astype(jnp.bfloat16), w_in_ref[...],
                    preferred_element_type=jnp.float32)
        h_ref[...] = jnp.maximum(y + b_hid_ref[0:1, :], 0.0)

    # Hidden layer l (weights w_hid[l], bias row l+1), ReLU. Activation stays
    # f32 in VMEM scratch; cast to bf16 only at the MXU input.
    y = jnp.dot(h_ref[...].astype(jnp.bfloat16), w_hid_ref[0],
                preferred_element_type=jnp.float32)
    h_ref[...] = jnp.maximum(y + b_hid_ref[pl.ds(l + 1, 1), :], 0.0)

    @pl.when(l == pl.num_programs(0) - 1)
    def _():
        # Layer 9: no ReLU; output is lane-padded to a multiple of 128.
        y = jnp.dot(h_ref[...].astype(jnp.bfloat16), w_out_ref[...],
                    preferred_element_type=jnp.float32)
        o_ref[...] = (y + b_out_ref[...]).astype(o_ref.dtype)


def init_params(key, inp_size, out_size):
    """Torch nn.Linear-style init (U[-1/sqrt(fan_in), +]); weights stored (in, out)."""
    sizes = [(inp_size, HIDDEN)] + [(HIDDEN, HIDDEN)] * N_HIDDEN + [(HIDDEN, out_size)]
    params = []
    for fan_in, fan_out in sizes:
        key, kw, kb = jax.random.split(key, 3)
        bound = 1.0 / jnp.sqrt(jnp.float32(fan_in))
        w = jax.random.uniform(kw, (fan_in, fan_out), jnp.float32, -bound, bound)
        b = jax.random.uniform(kb, (fan_out,), jnp.float32, -bound, bound)
        params.append((w, b))
    return params


def pack_params(params, out_pad):
    """Pack per-layer params into 5 arrays: bf16 weights + f32 biases."""
    w_in = params[0][0].astype(jnp.bfloat16)                         # (IN, 512)
    w_hid = jnp.stack([w.astype(jnp.bfloat16)
                       for (w, _) in params[1:1 + N_HIDDEN]])        # (7, 512, 512)
    w_out_raw, b_out_raw = params[-1]
    out_size = w_out_raw.shape[1]
    w_out = jnp.zeros((HIDDEN, out_pad), jnp.bfloat16)
    w_out = w_out.at[:, :out_size].set(w_out_raw.astype(jnp.bfloat16))
    b_hid = jnp.stack([b for (_, b) in params[:1 + N_HIDDEN]])       # (8, 512) f32
    b_out = jnp.zeros((1, out_pad), jnp.float32).at[0, :out_size].set(b_out_raw)
    return w_in, w_hid, w_out, b_hid, b_out


def nn_forward(x, params):
    batch, inp_size = x.shape
    out_size = params[-1][0].shape[1]
    out_pad = max(LANE, _round_up(out_size, LANE))
    b_pad = max(SUBLANE, _round_up(batch, SUBLANE))

    w_in, w_hid, w_out, b_hid, b_out = pack_params(params, out_pad)

    x_p = x
    if b_pad != batch:
        x_p = jnp.zeros((b_pad, inp_size), x.dtype).at[:batch].set(x)

    out_p = pl.pallas_call(
        _mlp_kernel,
        out_shape=jax.ShapeDtypeStruct((b_pad, out_pad), jnp.float32),
        grid_spec=pltpu.PrefetchScalarGridSpec(
            num_scalar_prefetch=0,
            grid=(N_HIDDEN,),
            in_specs=[
                pl.BlockSpec((b_pad, inp_size), lambda l: (0, 0)),       # x
                pl.BlockSpec((inp_size, HIDDEN), lambda l: (0, 0)),      # w_in
                pl.BlockSpec((1, HIDDEN, HIDDEN), lambda l: (l, 0, 0)),  # w_hid[l]
                pl.BlockSpec((HIDDEN, out_pad), lambda l: (0, 0)),       # w_out
                pl.BlockSpec((1 + N_HIDDEN, HIDDEN), lambda l: (0, 0)),  # b_hid
                pl.BlockSpec((1, out_pad), lambda l: (0, 0)),            # b_out
            ],
            out_specs=pl.BlockSpec((b_pad, out_pad), lambda l: (0, 0)),
            scratch_shapes=[pltpu.VMEM((b_pad, HIDDEN), jnp.float32)],
        ),
        compiler_params=pltpu.CompilerParams(
            dimension_semantics=("arbitrary",),   # layer chain is sequential
            vmem_limit_bytes=16 << 20,
        ),
    )(x_p, w_in, w_hid, w_out, b_hid, b_out)

    return out_p[:batch, :out_size]


def nn_forward_ref(x, params):
    """Pure-JAX reference matching the kernel's bf16-weight numerics."""
    h = x
    for (w, b) in params[:-1]:
        y = jnp.dot(h.astype(jnp.bfloat16), w.astype(jnp.bfloat16),
                    preferred_element_type=jnp.float32) + b
        h = jnp.maximum(y, 0.0)
    w, b = params[-1]
    return jnp.dot(h.astype(jnp.bfloat16), w.astype(jnp.bfloat16),
                   preferred_element_type=jnp.float32) + b


if __name__ == "__main__":
    inp_size, out_size, batch = 32, 16, 8

    key = jax.random.PRNGKey(0)
    key, kx = jax.random.split(key)
    x = jax.random.normal(kx, (batch, inp_size), jnp.float32)
    params = init_params(key, inp_size, out_size)

    out = nn_forward(x, params)
    out = jax.block_until_ready(out)

    ref = nn_forward_ref(x, params)
    assert out.shape == (batch, out_size)
    assert jnp.allclose(out, ref, atol=1e-2, rtol=1e-2), (
        float(jnp.max(jnp.abs(out - ref))))

    print("KERNEL_OK")
</pallas_src>

<mosaic_0001>
module attributes {stable_mosaic.version = 11 : i64} {
  func.func @_mlp_kernel(%arg0: i32, %arg1: memref<8x32xf32, #tpu.memory_space<vmem>>, %arg2: memref<32x512xbf16, #tpu.memory_space<vmem>>, %arg3: memref<1x512x512xbf16, #tpu.memory_space<vmem>>, %arg4: memref<512x128xbf16, #tpu.memory_space<vmem>>, %arg5: memref<8x512xf32, #tpu.memory_space<vmem>>, %arg6: memref<1x128xf32, #tpu.memory_space<vmem>>, %arg7: memref<8x128xf32, #tpu.memory_space<vmem>>, %arg8: memref<8x512xf32, #tpu.memory_space<vmem>>) attributes {dimension_semantics = [#tpu.dimension_semantics<arbitrary>], iteration_bounds = array<i64: 7>, scalar_prefetch = 0 : i64, scratch_operands = 1 : i64, tpu.core_type = #tpu.core_type<tc>, window_params = [{pipeline_mode = #tpu.pipeline_mode<synchronous>, transform_indices = @transform_0, window_bounds = array<i64: 8, 32>}, {pipeline_mode = #tpu.pipeline_mode<synchronous>, transform_indices = @transform_1, window_bounds = array<i64: 32, 512>}, {transform_indices = @transform_2, window_bounds = array<i64: 1, 512, 512>}, {pipeline_mode = #tpu.pipeline_mode<synchronous>, transform_indices = @transform_3, window_bounds = array<i64: 512, 128>}, {pipeline_mode = #tpu.pipeline_mode<synchronous>, transform_indices = @transform_4, window_bounds = array<i64: 8, 512>}, {pipeline_mode = #tpu.pipeline_mode<synchronous>, transform_indices = @transform_5, window_bounds = array<i64: 1, 128>}, {pipeline_mode = #tpu.pipeline_mode<synchronous>, transform_indices = @transform_6, window_bounds = array<i64: 8, 128>}]} {
    %c0_i32 = arith.constant 0 : i32
    %0 = arith.cmpi eq, %arg0, %c0_i32 : i32
    %1 = arith.extui %0 : i1 to i32
    %c0_i32_0 = arith.constant 0 : i32
    %2 = arith.cmpi ne, %1, %c0_i32_0 : i32
    scf.if %2 {
      %c0_10 = arith.constant 0 : index
      %c0_11 = arith.constant 0 : index
      %19 = vector.load %arg1[%c0_10, %c0_11] : memref<8x32xf32, #tpu.memory_space<vmem>>, vector<8x32xf32>
      %20 = arith.truncf %19 : vector<8x32xf32> to vector<8x32xbf16>
      %c0_12 = arith.constant 0 : index
      %c0_13 = arith.constant 0 : index
      %21 = vector.load %arg2[%c0_12, %c0_13] : memref<32x512xbf16, #tpu.memory_space<vmem>>, vector<32x512xbf16>
      %cst_14 = arith.constant dense<0.000000e+00> : vector<8x512xf32>
      %22 = tpu.matmul %20, %21, %cst_14 {dimension_numbers = #tpu.dot_dimension_numbers<[1], [0], [0], [1], [0, 0, 1, 1], [], []>} : vector<8x32xbf16>, vector<32x512xbf16>, vector<8x512xf32> -> vector<8x512xf32>
      %c0_15 = arith.constant 0 : index
      %c0_16 = arith.constant 0 : index
      %23 = vector.load %arg5[%c0_15, %c0_16] : memref<8x512xf32, #tpu.memory_space<vmem>>, vector<1x512xf32>
      %24 = vector.broadcast %23 : vector<1x512xf32> to vector<8x512xf32>
      %25 = arith.addf %22, %24 : vector<8x512xf32>
      %cst_17 = arith.constant 0.000000e+00 : f32
      %26 = vector.broadcast %cst_17 : f32 to vector<8x512xf32>
      %27 = arith.maximumf %25, %26 : vector<8x512xf32>
      %c0_18 = arith.constant 0 : index
      %c0_19 = arith.constant 0 : index
      %28 = vector.load %arg8[%c0_18, %c0_19] : memref<8x512xf32, #tpu.memory_space<vmem>>, vector<8x512xf32>
      tpu.vector_store %arg8[%c0_18, %c0_19], %27 {strides = array<i32>} : memref<8x512xf32, #tpu.memory_space<vmem>>, vector<8x512xf32>,
    } else {
    }
    %c0 = arith.constant 0 : index
    %c0_1 = arith.constant 0 : index
    %3 = vector.load %arg8[%c0, %c0_1] : memref<8x512xf32, #tpu.memory_space<vmem>>, vector<8x512xf32>
    %4 = arith.truncf %3 : vector<8x512xf32> to vector<8x512xbf16>
    %c0_2 = arith.constant 0 : index
    %c0_3 = arith.constant 0 : index
    %c0_4 = arith.constant 0 : index
    %5 = vector.load %arg3[%c0_2, %c0_3, %c0_4] : memref<1x512x512xbf16, #tpu.memory_space<vmem>>, vector<1x512x512xbf16>
    %6 = vector.shape_cast %5 : vector<1x512x512xbf16> to vector<512x512xbf16>
    %cst = arith.constant dense<0.000000e+00> : vector<8x512xf32>
    %7 = tpu.matmul %4, %6, %cst {dimension_numbers = #tpu.dot_dimension_numbers<[1], [0], [0], [1], [0, 0, 1, 1], [], []>} : vector<8x512xbf16>, vector<512x512xbf16>, vector<8x512xf32> -> vector<8x512xf32>
    %c1_i32 = arith.constant 1 : i32
    %8 = arith.addi %arg0, %c1_i32 : i32
    %9 = arith.index_cast %8 : i32 to index
    %c0_5 = arith.constant 0 : index
    %10 = vector.load %arg5[%9, %c0_5] : memref<8x512xf32, #tpu.memory_space<vmem>>, vector<1x512xf32>
    %11 = vector.broadcast %10 : vector<1x512xf32> to vector<8x512xf32>
    %12 = arith.addf %7, %11 : vector<8x512xf32>
    %cst_6 = arith.constant 0.000000e+00 : f32
    %13 = vector.broadcast %cst_6 : f32 to vector<8x512xf32>
    %14 = arith.maximumf %12, %13 : vector<8x512xf32>
    %c0_7 = arith.constant 0 : index
    %c0_8 = arith.constant 0 : index
    %15 = vector.load %arg8[%c0_7, %c0_8] : memref<8x512xf32, #tpu.memory_space<vmem>>, vector<8x512xf32>
    tpu.vector_store %arg8[%c0_7, %c0_8], %14 {strides = array<i32>} : memref<8x512xf32, #tpu.memory_space<vmem>>, vector<8x512xf32>,
    %c6_i32 = arith.constant 6 : i32
    %16 = arith.cmpi eq, %arg0, %c6_i32 : i32
    %17 = arith.extui %16 : i1 to i32
    %c0_i32_9 = arith.constant 0 : i32
    %18 = arith.cmpi ne, %17, %c0_i32_9 : i32
    scf.if %18 {
      %c0_10 = arith.constant 0 : index
      %c0_11 = arith.constant 0 : index
      %19 = vector.load %arg8[%c0_10, %c0_11] : memref<8x512xf32, #tpu.memory_space<vmem>>, vector<8x512xf32>
      %20 = arith.truncf %19 : vector<8x512xf32> to vector<8x512xbf16>
      %c0_12 = arith.constant 0 : index
      %c0_13 = arith.constant 0 : index
      %21 = vector.load %arg4[%c0_12, %c0_13] : memref<512x128xbf16, #tpu.memory_space<vmem>>, vector<512x128xbf16>
      %cst_14 = arith.constant dense<0.000000e+00> : vector<8x128xf32>
      %22 = tpu.matmul %20, %21, %cst_14 {dimension_numbers = #tpu.dot_dimension_numbers<[1], [0], [0], [1], [0, 0, 1, 1], [], []>} : vector<8x512xbf16>, vector<512x128xbf16>, vector<8x128xf32> -> vector<8x128xf32>
      %c0_15 = arith.constant 0 : index
      %c0_16 = arith.constant 0 : index
      %23 = vector.load %arg6[%c0_15, %c0_16] : memref<1x128xf32, #tpu.memory_space<vmem>>, vector<1x128xf32>
      %24 = vector.broadcast %23 : vector<1x128xf32> to vector<8x128xf32>
      %25 = arith.addf %22, %24 : vector<8x128xf32>
      %c0_17 = arith.constant 0 : index
      %c0_18 = arith.constant 0 : index
      %26 = vector.load %arg7[%c0_17, %c0_18] : memref<8x128xf32, #tpu.memory_space<vmem>>, vector<8x128xf32>
      tpu.vector_store %arg7[%c0_17, %c0_18], %25 {strides = array<i32>} : memref<8x128xf32, #tpu.memory_space<vmem>>, vector<8x128xf32>,
    } else {
    }
    return
  }
  func.func @transform_0(%arg0: i32) -> (i32, i32) {
    %c0_i32 = arith.constant 0 : i32
    %c0_i32_0 = arith.constant 0 : i32
    %c0_i32_1 = arith.constant 0 : i32
    return %c0_i32, %c0_i32_0 : i32, i32
  }
  func.func @transform_1(%arg0: i32) -> (i32, i32) {
    %c0_i32 = arith.constant 0 : i32
    %c0_i32_0 = arith.constant 0 : i32
    %c0_i32_1 = arith.constant 0 : i32
    return %c0_i32, %c0_i32_0 : i32, i32
  }
  func.func @transform_2(%arg0: i32) -> (i32, i32, i32) {
    %c0_i32 = arith.constant 0 : i32
    %c0_i32_0 = arith.constant 0 : i32
    %c0_i32_1 = arith.constant 0 : i32
    return %arg0, %c0_i32, %c0_i32_0 : i32, i32, i32
  }
  func.func @transform_3(%arg0: i32) -> (i32, i32) {
    %c0_i32 = arith.constant 0 : i32
    %c0_i32_0 = arith.constant 0 : i32
    %c0_i32_1 = arith.constant 0 : i32
    return %c0_i32, %c0_i32_0 : i32, i32
  }
  func.func @transform_4(%arg0: i32) -> (i32, i32) {
    %c0_i32 = arith.constant 0 : i32
    %c0_i32_0 = arith.constant 0 : i32
    %c0_i32_1 = arith.constant 0 : i32
    return %c0_i32, %c0_i32_0 : i32, i32
  }
  func.func @transform_5(%arg0: i32) -> (i32, i32) {
    %c0_i32 = arith.constant 0 : i32
    %c0_i32_0 = arith.constant 0 : i32
    %c0_i32_1 = arith.constant 0 : i32
    return %c0_i32, %c0_i32_0 : i32, i32
  }
  func.func @transform_6(%arg0: i32) -> (i32, i32) {
    %c0_i32 = arith.constant 0 : i32
    %c0_i32_0 = arith.constant 0 : i32
    %c0_i32_1 = arith.constant 0 : i32
    return %c0_i32, %c0_i32_0 : i32, i32
  }
}

</mosaic_0001>

<llo_original>
// kernel: tpu_custom_call.1
$region0: #{tpu_custom_call.1}
  #allocation0 [shape = 'u32[]', space=smem, size = 0x4, offset = 0x4, fixed_abs, tag = 'smem constant byte address 0x4 - core index']
  #allocation1 [shape = 'u32[144,128]{1,0:T(1,128)}', space=vmem, size = 0x12000, scoped, tag = 'internal scratch']
  #allocation2 [shape = 'f32[8,512]{1,0:T(8,128)}', space=vmem, size = 0x4000, scoped, tag = 'scratch operand']
  %s0 = inlined_call_operand.hbm [shape: f32[8,32], index: 0, kind: input, shape index: {}]
  %s1 = inlined_call_operand.hbm [shape: bf16[32,512], index: 1, kind: input, shape index: {}]
  %s2 = inlined_call_operand.hbm [shape: bf16[7,512,512], index: 2, kind: input, shape index: {}]
  %s3 = inlined_call_operand.hbm [shape: bf16[512,128], index: 3, kind: input, shape index: {}]
  %s4 = inlined_call_operand.hbm [shape: f32[8,512], index: 4, kind: input, shape index: {}]
  %s5 = inlined_call_operand.hbm [shape: f32[1,128], index: 5, kind: input, shape index: {}]
  %s6 = inlined_call_operand.hbm [shape: f32[8,128], index: 6, kind: output, shape index: {}]
  %s7 = sld [smem:[#allocation0]]
  $region89: #{tpu_custom_call.1} parent=0
    _
  %s9 = ssub.s32 1, %s7
  %s10 = scalar_select 0, %s9, %s7
  $region1: #{tpu_custom_call.1} parent=0
    #allocation3 [shape = 'u8[4096]{0}', space=vmem, size = 0x1000, scoped, tag = 'input window, operand 0, single buffered']
    #allocation4 [shape = 's32[2]{0}', space=sflag, size = 0x8, scoped, tag = 'scoped memory for tpu_custom_call.1']
    #allocation5 [shape = 's32[2]{0}', space=sflag, size = 0x8, scoped, tag = 'scoped memory for tpu_custom_call.1']
    #allocation6 [shape = 'u8[32768]{0}', space=vmem, size = 0x8000, scoped, tag = 'input window, operand 1, single buffered']
    #allocation7 [shape = 's32[1]{0}', space=sflag, size = 0x4, scoped, tag = 'scoped memory for tpu_custom_call.1']
    #allocation8 [shape = 'u8[1048576]{0}', space=vmem, size = 0x100000, scoped, tag = 'input window, operand 2']
    #allocation9 [shape = 'u8[131072]{0}', space=vmem, size = 0x20000, scoped, tag = 'input window, operand 3, single buffered']
    #allocation10 [shape = 'u8[16384]{0}', space=vmem, size = 0x4000, scoped, tag = 'input window, operand 4, single buffered']
    #allocation11 [shape = 's32[1]{0}', space=sflag, size = 0x4, scoped, tag = 'scoped memory for tpu_custom_call.1']
    #allocation12 [shape = 'u8[512]{0}', space=vmem, size = 0x400, scoped, tag = 'input window, operand 5, single buffered']
    #allocation13 [shape = 'u8[4096]{0}', space=vmem, size = 0x1000, scoped, tag = 'output window, operand 0, single buffered']
    %11 = vsyncpa [#allocation4], 0
    %12 = vsyncpa [#allocation7], 0
    %13 = vsyncpa [#allocation11], 0
    %14 = vsyncpa [#allocation5], 0
    loop: start=0, step=1, limit=9
    $region2: #{tpu_custom_call.1} parent=1 // loop_pre_header
      _
    $region3: #{tpu_custom_call.1} parent=1 // loop_header
      %s16 = sphi 0, %s20
      %p17 = scmp.ge.s32.totalorder %s16, 9
      %s24 = sphi 0, %s24
      %s26 = sphi 0, %s24
      %s27 = sphi 0, %s26
      %s41 = sphi 0, %s27
      %s45 = sphi 0, %s45
      %s47 = sphi 0, %s45
      %s48 = sphi 0, %s47
      %s62 = sphi 0, %s48
      %s68 = sphi 0, %s70
      %s71 = sphi 0, %s68
      %s72 = sphi 0, %s71
      %s88 = sphi 0, %s72
      %s92 = sphi 0, %s92
      %s94 = sphi 0, %s92
      %s95 = sphi 0, %s94
      %s109 = sphi 0, %s95
      %s113 = sphi 0, %s113
      %s115 = sphi 0, %s113
      %s116 = sphi 0, %s115
      %s130 = sphi 0, %s116
      %s134 = sphi 0, %s134
      %s136 = sphi 0, %s134
      %s137 = sphi 0, %s136
      %s151 = sphi 0, %s137
      %s155 = sphi 0, %s155
      %s157 = sphi 0, %s155
      %s158 = sphi 0, %s157
      %s172 = sphi 0, %s158
    $region4: #{tpu_custom_call.1} parent=1 // loop_header_branch
      %19 = sbr.rel (%p17) target = $region8
    $region5: #{tpu_custom_call.1} parent=1 // loop_body
      %s21 = ssub.s32 %s16, 1
      %s22 = ssub.s32 %s16, 2
      %s23 = sadd.s32 %s16, 1
      %s25 = sadd.s32 %s24, 1
      %p28 = scmp.eq.s32.totalorder %s16, 6
      %p29 = scmp.ne.s32.totalorder %s24, %s26
      %p30 = scmp.eq.s32.totalorder %s16, 0
      %p31 = por %p29, %p30
      %p32 = scmp.ne.s32.totalorder %s24, %s26
      %p33 = scmp.eq.s32.totalorder %s21, 6
      %p34 = por %p32, %p33
      %p35 = scmp.ne.s32.totalorder %s26, %s27
      %p36 = scmp.eq.s32.totalorder %s21, 0
      %p37 = por %p35, %p36
      %p38 = scmp.ne.s32.totalorder %s26, %s27
      %p39 = scmp.eq.s32.totalorder %s22, 6
      %p40 = por %p38, %p39
      %p42 = scmp.ne.s32.totalorder %s27, %s41
      %p43 = scmp.eq.s32.totalorder %s22, 0
      %p44 = por %p42, %p43
      %s46 = sadd.s32 %s45, 1
      %p49 = scmp.eq.s32.totalorder %s16, 6
      %p50 = scmp.ne.s32.totalorder %s45, %s47
      %p51 = scmp.eq.s32.totalorder %s16, 0
      %p52 = por %p50, %p51
      %p53 = scmp.ne.s32.totalorder %s45, %s47
      %p54 = scmp.eq.s32.totalorder %s21, 6
      %p55 = por %p53, %p54
      %p56 = scmp.ne.s32.totalorder %s47, %s48
      %p57 = scmp.eq.s32.totalorder %s21, 0
      %p58 = por %p56, %p57
      %p59 = scmp.ne.s32.totalorder %s47, %s48
      %p60 = scmp.eq.s32.totalorder %s22, 6
      %p61 = por %p59, %p60
      %p63 = scmp.ne.s32.totalorder %s48, %s62
      %p64 = scmp.eq.s32.totalorder %s22, 0
      %p65 = por %p63, %p64
      %s66 = ssub.s32 %s16, %s23
      %p67 = scmp.eq.s32.totalorder %s66, 0
      %s69 = sadd.s32 %s68, 1
      %s70 = scalar_select %p67, %s68, %s69
      %p73 = pneg %p67
      %p74 = scmp.eq.s32.totalorder %s16, 6
      %p75 = por %p73, %p74
      %p76 = scmp.ne.s32.totalorder %s68, %s71
      %p77 = scmp.eq.s32.totalorder %s16, 0
      %p78 = por %p76, %p77
      %p79 = scmp.ne.s32.totalorder %s68, %s71
      %p80 = scmp.eq.s32.totalorder %s21, 6
      %p81 = por %p79, %p80
      %p82 = scmp.ne.s32.totalorder %s71, %s72
      %p83 = scmp.eq.s32.totalorder %s21, 0
      %p84 = por %p82, %p83
      %p85 = scmp.ne.s32.totalorder %s71, %s72
      %p86 = scmp.eq.s32.totalorder %s22, 6
      %p87 = por %p85, %p86
      %p89 = scmp.ne.s32.totalorder %s72, %s88
      %p90 = scmp.eq.s32.totalorder %s22, 0
      %p91 = por %p89, %p90
      %s93 = sadd.s32 %s92, 1
      %p96 = scmp.eq.s32.totalorder %s16, 6
      %p97 = scmp.ne.s32.totalorder %s92, %s94
      %p98 = scmp.eq.s32.totalorder %s16, 0
      %p99 = por %p97, %p98
      %p100 = scmp.ne.s32.totalorder %s92, %s94
      %p101 = scmp.eq.s32.totalorder %s21, 6
      %p102 = por %p100, %p101
      %p103 = scmp.ne.s32.totalorder %s94, %s95
      %p104 = scmp.eq.s32.totalorder %s21, 0
      %p105 = por %p103, %p104
      %p106 = scmp.ne.s32.totalorder %s94, %s95
      %p107 = scmp.eq.s32.totalorder %s22, 6
      %p108 = por %p106, %p107
      %p110 = scmp.ne.s32.totalorder %s95, %s109
      %p111 = scmp.eq.s32.totalorder %s22, 0
      %p112 = por %p110, %p111
      %s114 = sadd.s32 %s113, 1
      %p117 = scmp.eq.s32.totalorder %s16, 6
      %p118 = scmp.ne.s32.totalorder %s113, %s115
      %p119 = scmp.eq.s32.totalorder %s16, 0
      %p120 = por %p118, %p119
      %p121 = scmp.ne.s32.totalorder %s113, %s115
      %p122 = scmp.eq.s32.totalorder %s21, 6
      %p123 = por %p121, %p122
      %p124 = scmp.ne.s32.totalorder %s115, %s116
      %p125 = scmp.eq.s32.totalorder %s21, 0
      %p126 = por %p124, %p125
      %p127 = scmp.ne.s32.totalorder %s115, %s116
      %p128 = scmp.eq.s32.totalorder %s22, 6
      %p129 = por %p127, %p128
      %p131 = scmp.ne.s32.totalorder %s116, %s130
      %p132 = scmp.eq.s32.totalorder %s22, 0
      %p133 = por %p131, %p132
      %s135 = sadd.s32 %s134, 1
      %p138 = scmp.eq.s32.totalorder %s16, 6
      %p139 = scmp.ne.s32.totalorder %s134, %s136
      %p140 = scmp.eq.s32.totalorder %s16, 0
      %p141 = por %p139, %p140
      %p142 = scmp.ne.s32.totalorder %s134, %s136
      %p143 = scmp.eq.s32.totalorder %s21, 6
      %p144 = por %p142, %p143
      %p145 = scmp.ne.s32.totalorder %s136, %s137
      %p146 = scmp.eq.s32.totalorder %s21, 0
      %p147 = por %p145, %p146
      %p148 = scmp.ne.s32.totalorder %s136, %s137
      %p149 = scmp.eq.s32.totalorder %s22, 6
      %p150 = por %p148, %p149
      %p152 = scmp.ne.s32.totalorder %s137, %s151
      %p153 = scmp.eq.s32.totalorder %s22, 0
      %p154 = por %p152, %p153
      %s156 = sadd.s32 %s155, 1
      %p159 = scmp.eq.s32.totalorder %s16, 6
      %p160 = scmp.ne.s32.totalorder %s155, %s157
      %p161 = scmp.eq.s32.totalorder %s16, 0
      %p162 = por %p160, %p161
      %p163 = scmp.ne.s32.totalorder %s155, %s157
      %p164 = scmp.eq.s32.totalorder %s21, 6
      %p165 = por %p163, %p164
      %p166 = scmp.ne.s32.totalorder %s157, %s158
      %p167 = scmp.eq.s32.totalorder %s21, 0
      %p168 = por %p166, %p167
      %p169 = scmp.ne.s32.totalorder %s157, %s158
      %p170 = scmp.eq.s32.totalorder %s22, 6
      %p171 = por %p169, %p170
      %p173 = scmp.ne.s32.totalorder %s158, %s172
      %p174 = scmp.eq.s32.totalorder %s22, 0
      %p175 = por %p173, %p174
      %p176 = scmp.le.s32.totalorder 1, %s16
      %p177 = scmp.lt.s32.totalorder %s16, 8
      %p178 = pnand %p176, %p177
      %p179 = pneg %p178
      // Predicated region
      $region9: #{tpu_custom_call.1} parent=5 // pred_check
        _
      $region10: #{tpu_custom_call.1} parent=5 // pred_check_branch
        %181 = sbr.rel (%p178) target = $region12
      $region11: #{tpu_custom_call.1} parent=5 // pred_region
        %s182 = ssub.s32 %s16, 1
        // Predicated region
        $region13: #{tpu_custom_call.1} parent=11 // pred_check
          %p183 = pneg %p37
        $region14: #{tpu_custom_call.1} parent=11 // pred_check_branch
          %185 = sbr.rel (%p183) target = $region16
        $region15: #{tpu_custom_call.1} parent=11 // pred_region
          %s187 = ssub.s32 128, 128
          %188 = vsyncadd [#allocation4], %s187
          %s190 = sshll.u32 [#allocation3], 4
          %s191 = int_to_ptr.vmem [resolvable:$true] %s190
          %193 = dma.hbm_to_vmem [thread:$0]  %s0, 128, %s191, [#allocation4]
        $region16: #{tpu_custom_call.1} parent=11 // pred_fallthru
          _
        // Predicated region
        $region17: #{tpu_custom_call.1} parent=11 // pred_check
          %p194 = pneg %p58
        $region18: #{tpu_custom_call.1} parent=11 // pred_check_branch
          %196 = sbr.rel (%p194) target = $region20
        $region19: #{tpu_custom_call.1} parent=11 // pred_region
          %s198 = ssub.s32 1024, 1024
          %199 = vsyncadd [#allocation7], %s198
          %s200 = sshll.u32 [#allocation6], 4
          %s201 = int_to_ptr.vmem [resolvable:$true] %s200
          %206 = dma.hbm_to_vmem [thread:$0]  %s1, 1024, %s201, [#allocation7], 256, 256, 16
        $region20: #{tpu_custom_call.1} parent=11 // pred_fallthru
          _
        // Predicated region
        $region21: #{tpu_custom_call.1} parent=11 // pred_check
          %p207 = pneg %p105
        $region22: #{tpu_custom_call.1} parent=11 // pred_check_branch
          %209 = sbr.rel (%p207) target = $region24
        $region23: #{tpu_custom_call.1} parent=11 // pred_region
          %s211 = ssub.s32 4096, 4096
          %212 = vsyncadd [#allocation7], %s211
          %s213 = sshll.u32 [#allocation9], 4
          %s214 = int_to_ptr.vmem [resolvable:$true] %s213
          %219 = dma.hbm_to_vmem [thread:$0]  %s3, 4096, %s214, [#allocation7], 64, 64, 4
        $region24: #{tpu_custom_call.1} parent=11 // pred_fallthru
          _
        // Predicated region
        $region25: #{tpu_custom_call.1} parent=11 // pred_check
          %p220 = pneg %p126
        $region26: #{tpu_custom_call.1} parent=11 // pred_check_branch
          %222 = sbr.rel (%p220) target = $region28
        $region27: #{tpu_custom_call.1} parent=11 // pred_region
          %s224 = ssub.s32 512, 512
          %225 = vsyncadd [#allocation11], %s224
          %s227 = sshll.u32 [#allocation10], 4
          %s228 = int_to_ptr.vmem [resolvable:$true] %s227
          %230 = dma.hbm_to_vmem [thread:$0]  %s4, 512, %s228, [#allocation11]
        $region28: #{tpu_custom_call.1} parent=11 // pred_fallthru
          _
        // Predicated region
        $region29: #{tpu_custom_call.1} parent=11 // pred_check
          %p231 = pneg %p147
        $region30: #{tpu_custom_call.1} parent=11 // pred_check_branch
          %233 = sbr.rel (%p231) target = $region32
        $region31: #{tpu_custom_call.1} parent=11 // pred_region
          %s235 = ssub.s32 16, 16
          %236 = vsyncadd [#allocation11], %s235
          %s238 = sshll.u32 [#allocation12], 4
          %s239 = int_to_ptr.vmem [resolvable:$true] %s238
          %241 = dma.hbm_to_vmem [thread:$0]  %s5, 16, %s239, [#allocation11]
        $region32: #{tpu_custom_call.1} parent=11 // pred_fallthru
          _
      $region12: #{tpu_custom_call.1} parent=5 // pred_fallthru
        _
      %p242 = scmp.lt.s32.totalorder %s16, 7
      // Predicated region
      $region33: #{tpu_custom_call.1} parent=5 // pred_check
        %p243 = pneg %p242
      $region34: #{tpu_custom_call.1} parent=5 // pred_check_branch
        %245 = sbr.rel (%p243) target = $region36
      $region35: #{tpu_custom_call.1} parent=5 // pred_region
        // Predicated region
        $region37: #{tpu_custom_call.1} parent=35 // pred_check
          %p246 = pneg %p78
        $region38: #{tpu_custom_call.1} parent=35 // pred_check_branch
          %248 = sbr.rel (%p246) target = $region40
        $region39: #{tpu_custom_call.1} parent=35 // pred_region
          %s249 = sand.u32 %s16, 1
          %s250 = scalar_lea.sflag [#allocation4], %s249
          %s251 = sand.u32 %s68, 1
          %s252 = smul.addr %s251, 1024
          %s253 = scalar_lea.vmem [#allocation8], %s252
          %s255 = ssub.s32 16384, 16384
          %256 = vsyncadd %s250, %s255
          %s257 = smul.addr %s16, 256
          %s258 = smul.addr %s257, 64
          %s259 = scalar_lea.hbm %s2, %s258
          %s260 = sshll.u32 %s253, 4
          %s261 = int_to_ptr.vmem [resolvable:$true] %s260
          %266 = dma.hbm_to_vmem [thread:$0]  %s259, 16384, %s261, %s250, 256, 256, 16
        $region40: #{tpu_custom_call.1} parent=35 // pred_fallthru
          _
      $region36: #{tpu_custom_call.1} parent=5 // pred_fallthru
        _
      %p267 = scmp.le.s32.totalorder 1, %s16
      %p268 = scmp.lt.s32.totalorder %s16, 8
      %p269 = pnand %p267, %p268
      %p270 = pneg %p269
      // Predicated region
      $region41: #{tpu_custom_call.1} parent=5 // pred_check
        _
      $region42: #{tpu_custom_call.1} parent=5 // pred_check_branch
        %272 = sbr.rel (%p269) target = $region44
      $region43: #{tpu_custom_call.1} parent=5 // pred_region
        %s273 = ssub.s32 %s16, 1
        // Predicated region
        $region45: #{tpu_custom_call.1} parent=43 // pred_check
          %p274 = pneg %p37
        $region46: #{tpu_custom_call.1} parent=43 // pred_check_branch
          %276 = sbr.rel (%p274) target = $region48
        $region47: #{tpu_custom_call.1} parent=43 // pred_region
          %277 = dma.done [#allocation4], 128
        $region48: #{tpu_custom_call.1} parent=43 // pred_fallthru
          _
        // Predicated region
        $region49: #{tpu_custom_call.1} parent=43 // pred_check
          %p278 = pneg %p58
        $region50: #{tpu_custom_call.1} parent=43 // pred_check_branch
          %280 = sbr.rel (%p278) target = $region52
        $region51: #{tpu_custom_call.1} parent=43 // pred_region
          %281 = dma.done [#allocation7], 1024
        $region52: #{tpu_custom_call.1} parent=43 // pred_fallthru
          _
        %s282 = sand.u32 %s21, 1
        %s283 = scalar_lea.sflag [#allocation4], %s282
        %s284 = sand.u32 %s71, 1
        %s285 = smul.addr %s284, 1024
        %s286 = scalar_lea.vmem [#allocation8], %s285
        // Predicated region
        $region53: #{tpu_custom_call.1} parent=43 // pred_check
          %p287 = pneg %p84
        $region54: #{tpu_custom_call.1} parent=43 // pred_check_branch
          %289 = sbr.rel (%p287) target = $region56
        $region55: #{tpu_custom_call.1} parent=43 // pred_region
          %290 = dma.done %s283, 16384
        $region56: #{tpu_custom_call.1} parent=43 // pred_fallthru
          _
        // Predicated region
        $region57: #{tpu_custom_call.1} parent=43 // pred_check
          %p291 = pneg %p105
        $region58: #{tpu_custom_call.1} parent=43 // pred_check_branch
          %293 = sbr.rel (%p291) target = $region60
        $region59: #{tpu_custom_call.1} parent=43 // pred_region
          %294 = dma.done [#allocation7], 4096
        $region60: #{tpu_custom_call.1} parent=43 // pred_fallthru
          _
        // Predicated region
        $region61: #{tpu_custom_call.1} parent=43 // pred_check
          %p295 = pneg %p126
        $region62: #{tpu_custom_call.1} parent=43 // pred_check_branch
          %297 = sbr.rel (%p295) target = $region64
        $region63: #{tpu_custom_call.1} parent=43 // pred_region
          %298 = dma.done [#allocation11], 512
        $region64: #{tpu_custom_call.1} parent=43 // pred_fallthru
          _
        // Predicated region
        $region65: #{tpu_custom_call.1} parent=43 // pred_check
          %p299 = pneg %p147
        $region66: #{tpu_custom_call.1} parent=43 // pred_check_branch
          %301 = sbr.rel (%p299) target = $region68
        $region67: #{tpu_custom_call.1} parent=43 // pred_region
          %302 = dma.done [#allocation11], 16
        $region68: #{tpu_custom_call.1} parent=43 // pred_fallthru
          _
        %p303 = pneg %p37
        %p304 = pneg %p34
        %p305 = pneg %p58
        %p306 = pneg %p55
        %s307 = sand.u32 %s21, 1
        %s308 = scalar_lea.sflag [#allocation4], %s307
        %s309 = sand.u32 %s71, 1
        %s310 = smul.addr %s309, 1024
        %s311 = scalar_lea.vmem [#allocation8], %s310
        %p312 = pneg %p84
        %p313 = pneg %p81
        %p314 = pneg %p105
        %p315 = pneg %p102
        %p316 = pneg %p126
        %p317 = pneg %p123
        %p318 = pneg %p147
        %p319 = pneg %p144
        %p320 = pneg %p168
        %p321 = pneg %p165
        %p323 = scmp.eq.s32.totalorder %s21, 0
        // Predicated region
        $region69: #{tpu_custom_call.1} parent=43 // pred_check
          %p324 = pneg %p323
        $region70: #{tpu_custom_call.1} parent=43 // pred_check_branch
          %326 = sbr.rel (%p324) target = $region72
        $region71: #{tpu_custom_call.1} parent=43 // pred_region
          %v327 = vld [vmem:[#allocation3] sm:$0xff]
          %v328 = vpack.c.bf16 %v327, %v327
          %v329 = vld [vmem:[#allocation6] sm:$0xff]
          %v330 = vld [vmem:[#allocation6 + $0x8] sm:$0xff]
          %v331 = vld [vmem:[#allocation6 + $0x10] sm:$0xff]
          %v332 = vld [vmem:[#allocation6 + $0x18] sm:$0xff]
          %v333 = vld [vmem:[#allocation6 + $0x20] sm:$0xff]
          %v334 = vld [vmem:[#allocation6 + $0x28] sm:$0xff]
          %v335 = vld [vmem:[#allocation6 + $0x30] sm:$0xff]
          %v336 = vld [vmem:[#allocation6 + $0x38] sm:$0xff]
          %v337 = vld [vmem:[#allocation10] ss:$8 sm:$0xf]
          %v339 = vlaneseq
          %v340 = vshrl.u32 %v339, 7
          %v341 = vsub.s32 0, %v340
          %v342 = vrot.slane %v337, %v341
          %v343 = vlaneseq
          %v344 = vshrl.u32 %v343, 7
          %v345 = vsub.s32 1, %v344
          %v346 = vrot.slane %v337, %v345
          %v347 = vlaneseq
          %v348 = vshrl.u32 %v347, 7
          %v349 = vsub.s32 2, %v348
          %v350 = vrot.slane %v337, %v349
          %v351 = vlaneseq
          %v352 = vshrl.u32 %v351, 7
          %v353 = vsub.s32 3, %v352
          %v354 = vrot.slane %v337, %v353
          %v367 = vunpack.c.l.b16 %v329
          %v368 = vunpack.c.h.b16 %v329
          %v369 = vunpack.c.l.b16 %v330
          %v370 = vunpack.c.h.b16 %v330
          %v371 = vunpack.c.l.b16 %v331
          %v372 = vunpack.c.h.b16 %v331
          %v373 = vunpack.c.l.b16 %v332
          %v374 = vunpack.c.h.b16 %v332
          %v375 = vunpack.c.l.b16 %v333
          %v376 = vunpack.c.h.b16 %v333
          %v377 = vunpack.c.l.b16 %v334
          %v378 = vunpack.c.h.b16 %v334
          %v379 = vunpack.c.l.b16 %v335
          %v380 = vunpack.c.h.b16 %v335
          %v381 = vunpack.c.l.b16 %v336
          %v382 = vunpack.c.h.b16 %v336
          %v383 = vpack.c.b16 %v371, %v367
          %v384 = vpack.c.b16 %v372, %v368
          %v385 = vpack.c.b16 %v373, %v369
          %v386 = vpack.c.b16 %v374, %v370
          %v387 = vpack.c.b16 %v379, %v375
          %v388 = vpack.c.b16 %v380, %v376
          %v389 = vpack.c.b16 %v381, %v377
          %v390 = vpack.c.b16 %v382, %v378
          %vm399 = vcmask 261120
          %v401 = vsel %vm399, %v328, 0
          %403 = vmatprep.subr.bf16.mxu0 0
          %404 = vmatpush1.bf16.msra.mxu0 0
          %405 = vmatprep.subr.bf16.mxu0 0
          %406 = vmatpush1.bf16.msra.mxu0 0
          %407 = vmatprep.subr.bf16.mxu0 0
          %408 = vmatpush1.bf16.msra.mxu0 0
          %409 = vmatprep.subr.bf16.mxu0 0
          %410 = vmatpush1.bf16.msra.mxu0 0
          %411 = vmatprep.subr.bf16.mxu0 0
          %412 = vmatpush1.bf16.msra.mxu0 0
          %413 = vmatprep.subr.bf16.mxu0 0
          %414 = vmatpush1.bf16.msra.mxu0 0
          %415 = vmatprep.subr.bf16.mxu0 %v388
          %416 = vmatpush1.bf16.msra.mxu0 %v387
          %417 = vmatprep.subr.bf16.mxu0 %v384
          %418 = vmatpush1.bf16.msra.mxu0 %v383
          %419 = vmatprep.subr.bf16.mxu0 0
          %420 = vmatpush2.bf16.msra.mxu0 0
          %421 = vmatprep.subr.bf16.mxu0 0
          %422 = vmatpush2.bf16.msra.mxu0 0
          %423 = vmatprep.subr.bf16.mxu0 0
          %424 = vmatpush2.bf16.msra.mxu0 0
          %425 = vmatprep.subr.bf16.mxu0 0
          %426 = vmatpush2.bf16.msra.mxu0 0
          %427 = vmatprep.subr.bf16.mxu0 0
          %428 = vmatpush2.bf16.msra.mxu0 0
          %429 = vmatprep.subr.bf16.mxu0 0
          %430 = vmatpush2.bf16.msra.mxu0 0
          %431 = vmatprep.subr.bf16.mxu0 0
          %432 = vmatpush2.bf16.msra.mxu0 0
          %433 = vmatprep.subr.bf16.mxu0 0
          %434 = vmatpush2.bf16.msra.mxu0 0
          %435 = vmatprep.mubr.bf16.mxu0 0
          %436 = vmatmul.mubr.bf16.gmra.mxu0 %v401
          %v437 = vpop.f32.mrf.mxu0
          %v438 = vadd.f32 %v342, %v437
          %v439 = vpop.f32.mrf.mxu0
          %v440 = vadd.f32 %v346, %v439
          %v441 = vpop.f32.mrf.mxu0
          %v442 = vpop.f32.mrf.mxu0
          %443 = vdwg.mxu0
          %444 = vmatprep.subr.bf16.mxu0 0
          %445 = vmatpush1.bf16.msra.mxu0 0
          %446 = vmatprep.subr.bf16.mxu0 0
          %447 = vmatpush1.bf16.msra.mxu0 0
          %448 = vmatprep.subr.bf16.mxu0 0
          %449 = vmatpush1.bf16.msra.mxu0 0
          %450 = vmatprep.subr.bf16.mxu0 0
          %451 = vmatpush1.bf16.msra.mxu0 0
          %452 = vmatprep.subr.bf16.mxu0 0
          %453 = vmatpush1.bf16.msra.mxu0 0
          %454 = vmatprep.subr.bf16.mxu0 0
          %455 = vmatpush1.bf16.msra.mxu0 0
          %456 = vmatprep.subr.bf16.mxu0 %v390
          %457 = vmatpush1.bf16.msra.mxu0 %v389
          %458 = vmatprep.subr.bf16.mxu0 %v386
          %459 = vmatpush1.bf16.msra.mxu0 %v385
          %460 = vmatprep.subr.bf16.mxu0 0
          %461 = vmatpush2.bf16.msra.mxu0 0
          %462 = vmatprep.subr.bf16.mxu0 0
          %463 = vmatpush2.bf16.msra.mxu0 0
          %464 = vmatprep.subr.bf16.mxu0 0
          %465 = vmatpush2.bf16.msra.mxu0 0
          %466 = vmatprep.subr.bf16.mxu0 0
          %467 = vmatpush2.bf16.msra.mxu0 0
          %468 = vmatprep.subr.bf16.mxu0 0
          %469 = vmatpush2.bf16.msra.mxu0 0
          %470 = vmatprep.subr.bf16.mxu0 0
          %471 = vmatpush2.bf16.msra.mxu0 0
          %472 = vmatprep.subr.bf16.mxu0 0
          %473 = vmatpush2.bf16.msra.mxu0 0
          %474 = vmatprep.subr.bf16.mxu0 0
          %475 = vmatpush2.bf16.msra.mxu0 0
          %476 = vmatprep.mubr.bf16.mxu0 0
          %477 = vmatmul.mubr.bf16.gmra.mxu0 %v401
          %v478 = vpop.f32.mrf.mxu0
          %v479 = vadd.f32 %v350, %v478
          %v480 = vpop.f32.mrf.mxu0
          %v481 = vadd.f32 %v354, %v480
          %v482 = vpop.f32.mrf.mxu0
          %v483 = vpop.f32.mrf.mxu0
          %484 = vdwg.mxu0
          %v485 = vmax.f32 %v438, 0.0
          %v486 = vmax.f32 %v440, 0.0
          %v487 = vmax.f32 %v479, 0.0
          %v488 = vmax.f32 %v481, 0.0
          %489 = vst [vmem:[#allocation2] sm:$0xff] %v485
          %490 = vst [vmem:[#allocation2 + $0x8] sm:$0xff] %v486
          %491 = vst [vmem:[#allocation2 + $0x10] sm:$0xff] %v487
          %492 = vst [vmem:[#allocation2 + $0x18] sm:$0xff] %v488
        $region72: #{tpu_custom_call.1} parent=43 // pred_fallthru
          _
        %v493 = vld [vmem:[#allocation2] sm:$0xff]
        %v494 = vld [vmem:[#allocation2 + $0x8] sm:$0xff]
        %v495 = vld [vmem:[#allocation2 + $0x10] sm:$0xff]
        %v496 = vld [vmem:[#allocation2 + $0x18] sm:$0xff]
        %v497 = vpack.c.bf16 %v493, %v493
        %v498 = vpack.c.bf16 %v494, %v494
        %v499 = vpack.c.bf16 %v495, %v495
        %v500 = vpack.c.bf16 %v496, %v496
        %v501 = vld [vmem:[%s286] sm:$0xff]
        %v502 = vld [vmem:[%s286 + $0x8] sm:$0xff]
        %v503 = vld [vmem:[%s286 + $0x10] sm:$0xff]
        %v504 = vld [vmem:[%s286 + $0x18] sm:$0xff]
        %v505 = vld [vmem:[%s286 + $0x20] sm:$0xff]
        %v506 = vld [vmem:[%s286 + $0x28] sm:$0xff]
        %v507 = vld [vmem:[%s286 + $0x30] sm:$0xff]
        %v508 = vld [vmem:[%s286 + $0x38] sm:$0xff]
        %v509 = vld [vmem:[%s286 + $0x40] sm:$0xff]
        %v510 = vld [vmem:[%s286 + $0x48] sm:$0xff]
        %v511 = vld [vmem:[%s286 + $0x50] sm:$0xff]
        %v512 = vld [vmem:[%s286 + $0x58] sm:$0xff]
        %v513 = vld [vmem:[%s286 + $0x60] sm:$0xff]
        %v514 = vld [vmem:[%s286 + $0x68] sm:$0xff]
        %v515 = vld [vmem:[%s286 + $0x70] sm:$0xff]
        %v516 = vld [vmem:[%s286 + $0x78] sm:$0xff]
        %v517 = vld [vmem:[%s286 + $0x80] sm:$0xff]
        %v518 = vld [vmem:[%s286 + $0x88] sm:$0xff]
        %v519 = vld [vmem:[%s286 + $0x90] sm:$0xff]
        %v520 = vld [vmem:[%s286 + $0x98] sm:$0xff]
        %v521 = vld [vmem:[%s286 + $0xa0] sm:$0xff]
        %v522 = vld [vmem:[%s286 + $0xa8] sm:$0xff]
        %v523 = vld [vmem:[%s286 + $0xb0] sm:$0xff]
        %v524 = vld [vmem:[%s286 + $0xb8] sm:$0xff]
        %v525 = vld [vmem:[%s286 + $0xc0] sm:$0xff]
        %v526 = vld [vmem:[%s286 + $0xc8] sm:$0xff]
        %v527 = vld [vmem:[%s286 + $0xd0] sm:$0xff]
        %v528 = vld [vmem:[%s286 + $0xd8] sm:$0xff]
        %v529 = vld [vmem:[%s286 + $0xe0] sm:$0xff]
        %v530 = vld [vmem:[%s286 + $0xe8] sm:$0xff]
        %v531 = vld [vmem:[%s286 + $0xf0] sm:$0xff]
        %v532 = vld [vmem:[%s286 + $0xf8] sm:$0xff]
        %v533 = vld [vmem:[%s286 + $0x100] sm:$0xff]
        %v534 = vld [vmem:[%s286 + $0x108] sm:$0xff]
        %v535 = vld [vmem:[%s286 + $0x110] sm:$0xff]
        %v536 = vld [vmem:[%s286 + $0x118] sm:$0xff]
        %v537 = vld [vmem:[%s286 + $0x120] sm:$0xff]
        %v538 = vld [vmem:[%s286 + $0x128] sm:$0xff]
        %v539 = vld [vmem:[%s286 + $0x130] sm:$0xff]
        %v540 = vld [vmem:[%s286 + $0x138] sm:$0xff]
        %v541 = vld [vmem:[%s286 + $0x140] sm:$0xff]
        %v542 = vld [vmem:[%s286 + $0x148] sm:$0xff]
        %v543 = vld [vmem:[%s286 + $0x150] sm:$0xff]
        %v544 = vld [vmem:[%s286 + $0x158] sm:$0xff]
        %v545 = vld [vmem:[%s286 + $0x160] sm:$0xff]
        %v546 = vld [vmem:[%s286 + $0x168] sm:$0xff]
        %v547 = vld [vmem:[%s286 + $0x170] sm:$0xff]
        %v548 = vld [vmem:[%s286 + $0x178] sm:$0xff]
        %v549 = vld [vmem:[%s286 + $0x180] sm:$0xff]
        %v550 = vld [vmem:[%s286 + $0x188] sm:$0xff]
        %v551 = vld [vmem:[%s286 + $0x190] sm:$0xff]
        %v552 = vld [vmem:[%s286 + $0x198] sm:$0xff]
        %v553 = vld [vmem:[%s286 + $0x1a0] sm:$0xff]
        %v554 = vld [vmem:[%s286 + $0x1a8] sm:$0xff]
        %v555 = vld [vmem:[%s286 + $0x1b0] sm:$0xff]
        %v556 = vld [vmem:[%s286 + $0x1b8] sm:$0xff]
        %v557 = vld [vmem:[%s286 + $0x1c0] sm:$0xff]
        %v558 = vld [vmem:[%s286 + $0x1c8] sm:$0xff]
        %v559 = vld [vmem:[%s286 + $0x1d0] sm:$0xff]
        %v560 = vld [vmem:[%s286 + $0x1d8] sm:$0xff]
        %v561 = vld [vmem:[%s286 + $0x1e0] sm:$0xff]
        %v562 = vld [vmem:[%s286 + $0x1e8] sm:$0xff]
        %v563 = vld [vmem:[%s286 + $0x1f0] sm:$0xff]
        %v564 = vld [vmem:[%s286 + $0x1f8] sm:$0xff]
        %v565 = vld [vmem:[%s286 + $0x200] sm:$0xff]
        %v566 = vld [vmem:[%s286 + $0x208] sm:$0xff]
        %v567 = vld [vmem:[%s286 + $0x210] sm:$0xff]
        %v568 = vld [vmem:[%s286 + $0x218] sm:$0xff]
        %v569 = vld [vmem:[%s286 + $0x220] sm:$0xff]
        %v570 = vld [vmem:[%s286 + $0x228] sm:$0xff]
        %v571 = vld [vmem:[%s286 + $0x230] sm:$0xff]
        %v572 = vld [vmem:[%s286 + $0x238] sm:$0xff]
        %v573 = vld [vmem:[%s286 + $0x240] sm:$0xff]
        %v574 = vld [vmem:[%s286 + $0x248] sm:$0xff]
        %v575 = vld [vmem:[%s286 + $0x250] sm:$0xff]
        %v576 = vld [vmem:[%s286 + $0x258] sm:$0xff]
        %v577 = vld [vmem:[%s286 + $0x260] sm:$0xff]
        %v578 = vld [vmem:[%s286 + $0x268] sm:$0xff]
        %v579 = vld [vmem:[%s286 + $0x270] sm:$0xff]
        %v580 = vld [vmem:[%s286 + $0x278] sm:$0xff]
        %v581 = vld [vmem:[%s286 + $0x280] sm:$0xff]
        %v582 = vld [vmem:[%s286 + $0x288] sm:$0xff]
        %v583 = vld [vmem:[%s286 + $0x290] sm:$0xff]
        %v584 = vld [vmem:[%s286 + $0x298] sm:$0xff]
        %v585 = vld [vmem:[%s286 + $0x2a0] sm:$0xff]
        %v586 = vld [vmem:[%s286 + $0x2a8] sm:$0xff]
        %v587 = vld [vmem:[%s286 + $0x2b0] sm:$0xff]
        %v588 = vld [vmem:[%s286 + $0x2b8] sm:$0xff]
        %v589 = vld [vmem:[%s286 + $0x2c0] sm:$0xff]
        %v590 = vld [vmem:[%s286 + $0x2c8] sm:$0xff]
        %v591 = vld [vmem:[%s286 + $0x2d0] sm:$0xff]
        %v592 = vld [vmem:[%s286 + $0x2d8] sm:$0xff]
        %v593 = vld [vmem:[%s286 + $0x2e0] sm:$0xff]
        %v594 = vld [vmem:[%s286 + $0x2e8] sm:$0xff]
        %v595 = vld [vmem:[%s286 + $0x2f0] sm:$0xff]
        %v596 = vld [vmem:[%s286 + $0x2f8] sm:$0xff]
        %v597 = vld [vmem:[%s286 + $0x300] sm:$0xff]
        %v598 = vld [vmem:[%s286 + $0x308] sm:$0xff]
        %v599 = vld [vmem:[%s286 + $0x310] sm:$0xff]
        %v600 = vld [vmem:[%s286 + $0x318] sm:$0xff]
        %v601 = vld [vmem:[%s286 + $0x320] sm:$0xff]
        %v602 = vld [vmem:[%s286 + $0x328] sm:$0xff]
        %v603 = vld [vmem:[%s286 + $0x330] sm:$0xff]
        %v604 = vld [vmem:[%s286 + $0x338] sm:$0xff]
        %v605 = vld [vmem:[%s286 + $0x340] sm:$0xff]
        %v606 = vld [vmem:[%s286 + $0x348] sm:$0xff]
        %v607 = vld [vmem:[%s286 + $0x350] sm:$0xff]
        %v608 = vld [vmem:[%s286 + $0x358] sm:$0xff]
        %v609 = vld [vmem:[%s286 + $0x360] sm:$0xff]
        %v610 = vld [vmem:[%s286 + $0x368] sm:$0xff]
        %v611 = vld [vmem:[%s286 + $0x370] sm:$0xff]
        %v612 = vld [vmem:[%s286 + $0x378] sm:$0xff]
        %v613 = vld [vmem:[%s286 + $0x380] sm:$0xff]
        %v614 = vld [vmem:[%s286 + $0x388] sm:$0xff]
        %v615 = vld [vmem:[%s286 + $0x390] sm:$0xff]
        %v616 = vld [vmem:[%s286 + $0x398] sm:$0xff]
        %v617 = vld [vmem:[%s286 + $0x3a0] sm:$0xff]
        %v618 = vld [vmem:[%s286 + $0x3a8] sm:$0xff]
        %v619 = vld [vmem:[%s286 + $0x3b0] sm:$0xff]
        %v620 = vld [vmem:[%s286 + $0x3b8] sm:$0xff]
        %v621 = vld [vmem:[%s286 + $0x3c0] sm:$0xff]
        %v622 = vld [vmem:[%s286 + $0x3c8] sm:$0xff]
        %v623 = vld [vmem:[%s286 + $0x3d0] sm:$0xff]
        %v624 = vld [vmem:[%s286 + $0x3d8] sm:$0xff]
        %v625 = vld [vmem:[%s286 + $0x3e0] sm:$0xff]
        %v626 = vld [vmem:[%s286 + $0x3e8] sm:$0xff]
        %v627 = vld [vmem:[%s286 + $0x3f0] sm:$0xff]
        %v628 = vld [vmem:[%s286 + $0x3f8] sm:$0xff]
        %s629 = sadd.s32 %s21, 1
        %s630 = sshra.s32 %s629, 3
        %s631 = sand.u32 %s629, 7
        %s632 = sshra.s32 %s629, 3
        %s633 = sand.u32 %s629, 7
        %s634 = smul.u32 %s630, 4
        %s635 = smul.u32 %s634, 8
        %s636 = sadd.s32 %s635, %s633
        %s637 = scalar_lea.vmem [#allocation10], %s636
        %v638 = vld [vmem:[%s637] ss:$8 sm:$0xf]
        %v640 = vlaneseq
        %v641 = vshrl.u32 %v640, 7
        %v642 = vsub.s32 0, %v641
        %v643 = vrot.slane %v638, %v642
        %v644 = vlaneseq
        %v645 = vshrl.u32 %v644, 7
        %v646 = vsub.s32 1, %v645
        %v647 = vrot.slane %v638, %v646
        %v648 = vlaneseq
        %v649 = vshrl.u32 %v648, 7
        %v650 = vsub.s32 2, %v649
        %v651 = vrot.slane %v638, %v650
        %v652 = vlaneseq
        %v653 = vshrl.u32 %v652, 7
        %v654 = vsub.s32 3, %v653
        %v655 = vrot.slane %v638, %v654
        %v788 = vunpack.c.l.b16 %v501
        %v789 = vunpack.c.h.b16 %v501
        %v790 = vunpack.c.l.b16 %v502
        %v791 = vunpack.c.h.b16 %v502
        %v792 = vunpack.c.l.b16 %v503
        %v793 = vunpack.c.h.b16 %v503
        %v794 = vunpack.c.l.b16 %v504
        %v795 = vunpack.c.h.b16 %v504
        %v796 = vunpack.c.l.b16 %v505
        %v797 = vunpack.c.h.b16 %v505
        %v798 = vunpack.c.l.b16 %v506
        %v799 = vunpack.c.h.b16 %v506
        %v800 = vunpack.c.l.b16 %v507
        %v801 = vunpack.c.h.b16 %v507
        %v802 = vunpack.c.l.b16 %v508
        %v803 = vunpack.c.h.b16 %v508
        %v804 = vunpack.c.l.b16 %v509
        %v805 = vunpack.c.h.b16 %v509
        %v806 = vunpack.c.l.b16 %v510
        %v807 = vunpack.c.h.b16 %v510
        %v808 = vunpack.c.l.b16 %v511
        %v809 = vunpack.c.h.b16 %v511
        %v810 = vunpack.c.l.b16 %v512
        %v811 = vunpack.c.h.b16 %v512
        %v812 = vunpack.c.l.b16 %v513
        %v813 = vunpack.c.h.b16 %v513
        %v814 = vunpack.c.l.b16 %v514
        %v815 = vunpack.c.h.b16 %v514
        %v816 = vunpack.c.l.b16 %v515
        %v817 = vunpack.c.h.b16 %v515
        %v818 = vunpack.c.l.b16 %v516
        %v819 = vunpack.c.h.b16 %v516
        %v820 = vunpack.c.l.b16 %v517
        %v821 = vunpack.c.h.b16 %v517
        %v822 = vunpack.c.l.b16 %v518
        %v823 = vunpack.c.h.b16 %v518
        %v824 = vunpack.c.l.b16 %v519
        %v825 = vunpack.c.h.b16 %v519
        %v826 = vunpack.c.l.b16 %v520
        %v827 = vunpack.c.h.b16 %v520
        %v828 = vunpack.c.l.b16 %v521
        %v829 = vunpack.c.h.b16 %v521
        %v830 = vunpack.c.l.b16 %v522
        %v831 = vunpack.c.h.b16 %v522
        %v832 = vunpack.c.l.b16 %v523
        %v833 = vunpack.c.h.b16 %v523
        %v834 = vunpack.c.l.b16 %v524
        %v835 = vunpack.c.h.b16 %v524
        %v836 = vunpack.c.l.b16 %v525
        %v837 = vunpack.c.h.b16 %v525
        %v838 = vunpack.c.l.b16 %v526
        %v839 = vunpack.c.h.b16 %v526
        %v840 = vunpack.c.l.b16 %v527
        %v841 = vunpack.c.h.b16 %v527
        %v842 = vunpack.c.l.b16 %v528
        %v843 = vunpack.c.h.b16 %v528
        %v844 = vunpack.c.l.b16 %v529
        %v845 = vunpack.c.h.b16 %v529
        %v846 = vunpack.c.l.b16 %v530
        %v847 = vunpack.c.h.b16 %v530
        %v848 = vunpack.c.l.b16 %v531
        %v849 = vunpack.c.h.b16 %v531
        %v850 = vunpack.c.l.b16 %v532
        %v851 = vunpack.c.h.b16 %v532
        %v852 = vunpack.c.l.b16 %v533
        %v853 = vunpack.c.h.b16 %v533
        %v854 = vunpack.c.l.b16 %v534
        %v855 = vunpack.c.h.b16 %v534
        %v856 = vunpack.c.l.b16 %v535
        %v857 = vunpack.c.h.b16 %v535
        %v858 = vunpack.c.l.b16 %v536
        %v859 = vunpack.c.h.b16 %v536
        %v860 = vunpack.c.l.b16 %v537
        %v861 = vunpack.c.h.b16 %v537
        %v862 = vunpack.c.l.b16 %v538
        %v863 = vunpack.c.h.b16 %v538
        %v864 = vunpack.c.l.b16 %v539
        %v865 = vunpack.c.h.b16 %v539
        %v866 = vunpack.c.l.b16 %v540
        %v867 = vunpack.c.h.b16 %v540
        %v868 = vunpack.c.l.b16 %v541
        %v869 = vunpack.c.h.b16 %v541
        %v870 = vunpack.c.l.b16 %v542
        %v871 = vunpack.c.h.b16 %v542
        %v872 = vunpack.c.l.b16 %v543
        %v873 = vunpack.c.h.b16 %v543
        %v874 = vunpack.c.l.b16 %v544
        %v875 = vunpack.c.h.b16 %v544
        %v876 = vunpack.c.l.b16 %v545
        %v877 = vunpack.c.h.b16 %v545
        %v878 = vunpack.c.l.b16 %v546
        %v879 = vunpack.c.h.b16 %v546
        %v880 = vunpack.c.l.b16 %v547
        %v881 = vunpack.c.h.b16 %v547
        %v882 = vunpack.c.l.b16 %v548
        %v883 = vunpack.c.h.b16 %v548
        %v884 = vunpack.c.l.b16 %v549
        %v885 = vunpack.c.h.b16 %v549
        %v886 = vunpack.c.l.b16 %v550
        %v887 = vunpack.c.h.b16 %v550
        %v888 = vunpack.c.l.b16 %v551
        %v889 = vunpack.c.h.b16 %v551
        %v890 = vunpack.c.l.b16 %v552
        %v891 = vunpack.c.h.b16 %v552
        %v892 = vunpack.c.l.b16 %v553
        %v893 = vunpack.c.h.b16 %v553
        %v894 = vunpack.c.l.b16 %v554
        %v895 = vunpack.c.h.b16 %v554
        %v896 = vunpack.c.l.b16 %v555
        %v897 = vunpack.c.h.b16 %v555
        %v898 = vunpack.c.l.b16 %v556
        %v899 = vunpack.c.h.b16 %v556
        %v900 = vunpack.c.l.b16 %v557
        %v901 = vunpack.c.h.b16 %v557
        %v902 = vunpack.c.l.b16 %v558
        %v903 = vunpack.c.h.b16 %v558
        %v904 = vunpack.c.l.b16 %v559
        %v905 = vunpack.c.h.b16 %v559
        %v906 = vunpack.c.l.b16 %v560
        %v907 = vunpack.c.h.b16 %v560
        %v908 = vunpack.c.l.b16 %v561
        %v909 = vunpack.c.h.b16 %v561
        %v910 = vunpack.c.l.b16 %v562
        %v911 = vunpack.c.h.b16 %v562
        %v912 = vunpack.c.l.b16 %v563
        %v913 = vunpack.c.h.b16 %v563
        %v914 = vunpack.c.l.b16 %v564
        %v915 = vunpack.c.h.b16 %v564
        %v916 = vunpack.c.l.b16 %v565
        %v917 = vunpack.c.h.b16 %v565
        %v918 = vunpack.c.l.b16 %v566
        %v919 = vunpack.c.h.b16 %v566
        %v920 = vunpack.c.l.b16 %v567
        %v921 = vunpack.c.h.b16 %v567
        %v922 = vunpack.c.l.b16 %v568
        %v923 = vunpack.c.h.b16 %v568
        %v924 = vunpack.c.l.b16 %v569
        %v925 = vunpack.c.h.b16 %v569
        %v926 = vunpack.c.l.b16 %v570
        %v927 = vunpack.c.h.b16 %v570
        %v928 = vunpack.c.l.b16 %v571
        %v929 = vunpack.c.h.b16 %v571
        %v930 = vunpack.c.l.b16 %v572
        %v931 = vunpack.c.h.b16 %v572
        %v932 = vunpack.c.l.b16 %v573
        %v933 = vunpack.c.h.b16 %v573
        %v934 = vunpack.c.l.b16 %v574
        %v935 = vunpack.c.h.b16 %v574
        %v936 = vunpack.c.l.b16 %v575
        %v937 = vunpack.c.h.b16 %v575
        %v938 = vunpack.c.l.b16 %v576
        %v939 = vunpack.c.h.b16 %v576
        %v940 = vunpack.c.l.b16 %v577
        %v941 = vunpack.c.h.b16 %v577
        %v942 = vunpack.c.l.b16 %v578
        %v943 = vunpack.c.h.b16 %v578
        %v944 = vunpack.c.l.b16 %v579
        %v945 = vunpack.c.h.b16 %v579
        %v946 = vunpack.c.l.b16 %v580
        %v947 = vunpack.c.h.b16 %v580
        %v948 = vunpack.c.l.b16 %v581
        %v949 = vunpack.c.h.b16 %v581
        %v950 = vunpack.c.l.b16 %v582
        %v951 = vunpack.c.h.b16 %v582
        %v952 = vunpack.c.l.b16 %v583
        %v953 = vunpack.c.h.b16 %v583
        %v954 = vunpack.c.l.b16 %v584
        %v955 = vunpack.c.h.b16 %v584
        %v956 = vunpack.c.l.b16 %v585
        %v957 = vunpack.c.h.b16 %v585
        %v958 = vunpack.c.l.b16 %v586
        %v959 = vunpack.c.h.b16 %v586
        %v960 = vunpack.c.l.b16 %v587
        %v961 = vunpack.c.h.b16 %v587
        %v962 = vunpack.c.l.b16 %v588
        %v963 = vunpack.c.h.b16 %v588
        %v964 = vunpack.c.l.b16 %v589
        %v965 = vunpack.c.h.b16 %v589
        %v966 = vunpack.c.l.b16 %v590
        %v967 = vunpack.c.h.b16 %v590
        %v968 = vunpack.c.l.b16 %v591
        %v969 = vunpack.c.h.b16 %v591
        %v970 = vunpack.c.l.b16 %v592
        %v971 = vunpack.c.h.b16 %v592
        %v972 = vunpack.c.l.b16 %v593
        %v973 = vunpack.c.h.b16 %v593
        %v974 = vunpack.c.l.b16 %v594
        %v975 = vunpack.c.h.b16 %v594
        %v976 = vunpack.c.l.b16 %v595
        %v977 = vunpack.c.h.b16 %v595
        %v978 = vunpack.c.l.b16 %v596
        %v979 = vunpack.c.h.b16 %v596
        %v980 = vunpack.c.l.b16 %v597
        %v981 = vunpack.c.h.b16 %v597
        %v982 = vunpack.c.l.b16 %v598
        %v983 = vunpack.c.h.b16 %v598
        %v984 = vunpack.c.l.b16 %v599
        %v985 = vunpack.c.h.b16 %v599
        %v986 = vunpack.c.l.b16 %v600
        %v987 = vunpack.c.h.b16 %v600
        %v988 = vunpack.c.l.b16 %v601
        %v989 = vunpack.c.h.b16 %v601
        %v990 = vunpack.c.l.b16 %v602
        %v991 = vunpack.c.h.b16 %v602
        %v992 = vunpack.c.l.b16 %v603
        %v993 = vunpack.c.h.b16 %v603
        %v994 = vunpack.c.l.b16 %v604
        %v995 = vunpack.c.h.b16 %v604
        %v996 = vunpack.c.l.b16 %v605
        %v997 = vunpack.c.h.b16 %v605
        %v998 = vunpack.c.l.b16 %v606
        %v999 = vunpack.c.h.b16 %v606
        %v1000 = vunpack.c.l.b16 %v607
        %v1001 = vunpack.c.h.b16 %v607
        %v1002 = vunpack.c.l.b16 %v608
        %v1003 = vunpack.c.h.b16 %v608
        %v1004 = vunpack.c.l.b16 %v609
        %v1005 = vunpack.c.h.b16 %v609
        %v1006 = vunpack.c.l.b16 %v610
        %v1007 = vunpack.c.h.b16 %v610
        %v1008 = vunpack.c.l.b16 %v611
        %v1009 = vunpack.c.h.b16 %v611
        %v1010 = vunpack.c.l.b16 %v612
        %v1011 = vunpack.c.h.b16 %v612
        %v1012 = vunpack.c.l.b16 %v613
        %v1013 = vunpack.c.h.b16 %v613
        %v1014 = vunpack.c.l.b16 %v614
        %v1015 = vunpack.c.h.b16 %v614
        %v1016 = vunpack.c.l.b16 %v615
        %v1017 = vunpack.c.h.b16 %v615
        %v1018 = vunpack.c.l.b16 %v616
        %v1019 = vunpack.c.h.b16 %v616
        %v1020 = vunpack.c.l.b16 %v617
        %v1021 = vunpack.c.h.b16 %v617
        %v1022 = vunpack.c.l.b16 %v618
        %v1023 = vunpack.c.h.b16 %v618
        %v1024 = vunpack.c.l.b16 %v619
        %v1025 = vunpack.c.h.b16 %v619
        %v1026 = vunpack.c.l.b16 %v620
        %v1027 = vunpack.c.h.b16 %v620
        %v1028 = vunpack.c.l.b16 %v621
        %v1029 = vunpack.c.h.b16 %v621
        %v1030 = vunpack.c.l.b16 %v622
        %v1031 = vunpack.c.h.b16 %v622
        %v1032 = vunpack.c.l.b16 %v623
        %v1033 = vunpack.c.h.b16 %v623
        %v1034 = vunpack.c.l.b16 %v624
        %v1035 = vunpack.c.h.b16 %v624
        %v1036 = vunpack.c.l.b16 %v625
        %v1037 = vunpack.c.h.b16 %v625
        %v1038 = vunpack.c.l.b16 %v626
        %v1039 = vunpack.c.h.b16 %v626
        %v1040 = vunpack.c.l.b16 %v627
        %v1041 = vunpack.c.h.b16 %v627
        %v1042 = vunpack.c.l.b16 %v628
        %v1043 = vunpack.c.h.b16 %v628
        %v1044 = vpack.c.b16 %v792, %v788
        %v1045 = vpack.c.b16 %v793, %v789
        %v1046 = vpack.c.b16 %v794, %v790
        %v1047 = vpack.c.b16 %v795, %v791
        %v1048 = vpack.c.b16 %v800, %v796
        %v1049 = vpack.c.b16 %v801, %v797
        %v1050 = vpack.c.b16 %v802, %v798
        %v1051 = vpack.c.b16 %v803, %v799
        %v1052 = vpack.c.b16 %v808, %v804
        %v1053 = vpack.c.b16 %v809, %v805
        %v1054 = vpack.c.b16 %v810, %v806
        %v1055 = vpack.c.b16 %v811, %v807
        %v1056 = vpack.c.b16 %v816, %v812
        %v1057 = vpack.c.b16 %v817, %v813
        %v1058 = vpack.c.b16 %v818, %v814
        %v1059 = vpack.c.b16 %v819, %v815
        %v1060 = vpack.c.b16 %v824, %v820
        %v1061 = vpack.c.b16 %v825, %v821
        %v1062 = vpack.c.b16 %v826, %v822
        %v1063 = vpack.c.b16 %v827, %v823
        %v1064 = vpack.c.b16 %v832, %v828
        %v1065 = vpack.c.b16 %v833, %v829
        %v1066 = vpack.c.b16 %v834, %v830
        %v1067 = vpack.c.b16 %v835, %v831
        %v1068 = vpack.c.b16 %v840, %v836
        %v1069 = vpack.c.b16 %v841, %v837
        %v1070 = vpack.c.b16 %v842, %v838
        %v1071 = vpack.c.b16 %v843, %v839
        %v1072 = vpack.c.b16 %v848, %v844
        %v1073 = vpack.c.b16 %v849, %v845
        %v1074 = vpack.c.b16 %v850, %v846
        %v1075 = vpack.c.b16 %v851, %v847
        %v1076 = vpack.c.b16 %v856, %v852
        %v1077 = vpack.c.b16 %v857, %v853
        %v1078 = vpack.c.b16 %v858, %v854
        %v1079 = vpack.c.b16 %v859, %v855
        %v1080 = vpack.c.b16 %v864, %v860
        %v1081 = vpack.c.b16 %v865, %v861
        %v1082 = vpack.c.b16 %v866, %v862
        %v1083 = vpack.c.b16 %v867, %v863
        %v1084 = vpack.c.b16 %v872, %v868
        %v1085 = vpack.c.b16 %v873, %v869
        %v1086 = vpack.c.b16 %v874, %v870
        %v1087 = vpack.c.b16 %v875, %v871
        %v1088 = vpack.c.b16 %v880, %v876
        %v1089 = vpack.c.b16 %v881, %v877
        %v1090 = vpack.c.b16 %v882, %v878
        %v1091 = vpack.c.b16 %v883, %v879
        %v1092 = vpack.c.b16 %v888, %v884
        %v1093 = vpack.c.b16 %v889, %v885
        %v1094 = vpack.c.b16 %v890, %v886
        %v1095 = vpack.c.b16 %v891, %v887
        %v1096 = vpack.c.b16 %v896, %v892
        %v1097 = vpack.c.b16 %v897, %v893
        %v1098 = vpack.c.b16 %v898, %v894
        %v1099 = vpack.c.b16 %v899, %v895
        %v1100 = vpack.c.b16 %v904, %v900
        %v1101 = vpack.c.b16 %v905, %v901
        %v1102 = vpack.c.b16 %v906, %v902
        %v1103 = vpack.c.b16 %v907, %v903
        %v1104 = vpack.c.b16 %v912, %v908
        %v1105 = vpack.c.b16 %v913, %v909
        %v1106 = vpack.c.b16 %v914, %v910
        %v1107 = vpack.c.b16 %v915, %v911
        %v1108 = vpack.c.b16 %v920, %v916
        %v1109 = vpack.c.b16 %v921, %v917
        %v1110 = vpack.c.b16 %v922, %v918
        %v1111 = vpack.c.b16 %v923, %v919
        %v1112 = vpack.c.b16 %v928, %v924
        %v1113 = vpack.c.b16 %v929, %v925
        %v1114 = vpack.c.b16 %v930, %v926
        %v1115 = vpack.c.b16 %v931, %v927
        %v1116 = vpack.c.b16 %v936, %v932
        %v1117 = vpack.c.b16 %v937, %v933
        %v1118 = vpack.c.b16 %v938, %v934
        %v1119 = vpack.c.b16 %v939, %v935
        %v1120 = vpack.c.b16 %v944, %v940
        %v1121 = vpack.c.b16 %v945, %v941
        %v1122 = vpack.c.b16 %v946, %v942
        %v1123 = vpack.c.b16 %v947, %v943
        %v1124 = vpack.c.b16 %v952, %v948
        %v1125 = vpack.c.b16 %v953, %v949
        %v1126 = vpack.c.b16 %v954, %v950
        %v1127 = vpack.c.b16 %v955, %v951
        %v1128 = vpack.c.b16 %v960, %v956
        %v1129 = vpack.c.b16 %v961, %v957
        %v1130 = vpack.c.b16 %v962, %v958
        %v1131 = vpack.c.b16 %v963, %v959
        %v1132 = vpack.c.b16 %v968, %v964
        %v1133 = vpack.c.b16 %v969, %v965
        %v1134 = vpack.c.b16 %v970, %v966
        %v1135 = vpack.c.b16 %v971, %v967
        %v1136 = vpack.c.b16 %v976, %v972
        %v1137 = vpack.c.b16 %v977, %v973
        %v1138 = vpack.c.b16 %v978, %v974
        %v1139 = vpack.c.b16 %v979, %v975
        %v1140 = vpack.c.b16 %v984, %v980
        %v1141 = vpack.c.b16 %v985, %v981
        %v1142 = vpack.c.b16 %v986, %v982
        %v1143 = vpack.c.b16 %v987, %v983
        %v1144 = vpack.c.b16 %v992, %v988
        %v1145 = vpack.c.b16 %v993, %v989
        %v1146 = vpack.c.b16 %v994, %v990
        %v1147 = vpack.c.b16 %v995, %v991
        %v1148 = vpack.c.b16 %v1000, %v996
        %v1149 = vpack.c.b16 %v1001, %v997
        %v1150 = vpack.c.b16 %v1002, %v998
        %v1151 = vpack.c.b16 %v1003, %v999
        %v1152 = vpack.c.b16 %v1008, %v1004
        %v1153 = vpack.c.b16 %v1009, %v1005
        %v1154 = vpack.c.b16 %v1010, %v1006
        %v1155 = vpack.c.b16 %v1011, %v1007
        %v1156 = vpack.c.b16 %v1016, %v1012
        %v1157 = vpack.c.b16 %v1017, %v1013
        %v1158 = vpack.c.b16 %v1018, %v1014
        %v1159 = vpack.c.b16 %v1019, %v1015
        %v1160 = vpack.c.b16 %v1024, %v1020
        %v1161 = vpack.c.b16 %v1025, %v1021
        %v1162 = vpack.c.b16 %v1026, %v1022
        %v1163 = vpack.c.b16 %v1027, %v1023
        %v1164 = vpack.c.b16 %v1032, %v1028
        %v1165 = vpack.c.b16 %v1033, %v1029
        %v1166 = vpack.c.b16 %v1034, %v1030
        %v1167 = vpack.c.b16 %v1035, %v1031
        %v1168 = vpack.c.b16 %v1040, %v1036
        %v1169 = vpack.c.b16 %v1041, %v1037
        %v1170 = vpack.c.b16 %v1042, %v1038
        %v1171 = vpack.c.b16 %v1043, %v1039
        %1300 = vmatprep.subr.bf16.mxu0 %v1073
        %1301 = vmatpush1.bf16.msra.mxu0 %v1072
        %1302 = vmatprep.subr.bf16.mxu0 %v1069
        %1303 = vmatpush1.bf16.msra.mxu0 %v1068
        %1304 = vmatprep.subr.bf16.mxu0 %v1065
        %1305 = vmatpush1.bf16.msra.mxu0 %v1064
        %1306 = vmatprep.subr.bf16.mxu0 %v1061
        %1307 = vmatpush1.bf16.msra.mxu0 %v1060
        %1308 = vmatprep.subr.bf16.mxu0 %v1057
        %1309 = vmatpush1.bf16.msra.mxu0 %v1056
        %1310 = vmatprep.subr.bf16.mxu0 %v1053
        %1311 = vmatpush1.bf16.msra.mxu0 %v1052
        %1312 = vmatprep.subr.bf16.mxu0 %v1049
        %1313 = vmatpush1.bf16.msra.mxu0 %v1048
        %1314 = vmatprep.subr.bf16.mxu0 %v1045
        %1315 = vmatpush1.bf16.msra.mxu0 %v1044
        %1316 = vmatprep.subr.bf16.mxu0 %v1105
        %1317 = vmatpush2.bf16.msra.mxu0 %v1104
        %1318 = vmatprep.subr.bf16.mxu0 %v1101
        %1319 = vmatpush2.bf16.msra.mxu0 %v1100
        %1320 = vmatprep.subr.bf16.mxu0 %v1097
        %1321 = vmatpush2.bf16.msra.mxu0 %v1096
        %1322 = vmatprep.subr.bf16.mxu0 %v1093
        %1323 = vmatpush2.bf16.msra.mxu0 %v1092
        %1324 = vmatprep.subr.bf16.mxu0 %v1089
        %1325 = vmatpush2.bf16.msra.mxu0 %v1088
        %1326 = vmatprep.subr.bf16.mxu0 %v1085
        %1327 = vmatpush2.bf16.msra.mxu0 %v1084
        %1328 = vmatprep.subr.bf16.mxu0 %v1081
        %1329 = vmatpush2.bf16.msra.mxu0 %v1080
        %1330 = vmatprep.subr.bf16.mxu0 %v1077
        %1331 = vmatpush2.bf16.msra.mxu0 %v1076
        %1332 = vmatprep.mubr.bf16.mxu0 %v498
        %1333 = vmatmul.mubr.bf16.gmra.mxu0 %v497
        %v1334 = vpop.f32.mrf.mxu0
        %v1335 = vadd.f32 %v643, %v1334
        %v1336 = vpop.f32.mrf.mxu0
        %v1337 = vadd.f32 %v647, %v1336
        %v1338 = vpop.f32.mrf.mxu0
        %v1339 = vpop.f32.mrf.mxu0
        %1340 = vdwg.mxu0
        %1341 = vmatprep.subr.bf16.mxu0 %v1137
        %1342 = vmatpush1.bf16.msra.mxu0 %v1136
        %1343 = vmatprep.subr.bf16.mxu0 %v1133
        %1344 = vmatpush1.bf16.msra.mxu0 %v1132
        %1345 = vmatprep.subr.bf16.mxu0 %v1129
        %1346 = vmatpush1.bf16.msra.mxu0 %v1128
        %1347 = vmatprep.subr.bf16.mxu0 %v1125
        %1348 = vmatpush1.bf16.msra.mxu0 %v1124
        %1349 = vmatprep.subr.bf16.mxu0 %v1121
        %1350 = vmatpush1.bf16.msra.mxu0 %v1120
        %1351 = vmatprep.subr.bf16.mxu0 %v1117
        %1352 = vmatpush1.bf16.msra.mxu0 %v1116
        %1353 = vmatprep.subr.bf16.mxu0 %v1113
        %1354 = vmatpush1.bf16.msra.mxu0 %v1112
        %1355 = vmatprep.subr.bf16.mxu0 %v1109
        %1356 = vmatpush1.bf16.msra.mxu0 %v1108
        %1357 = vmatprep.subr.bf16.mxu0 %v1169
        %1358 = vmatpush2.bf16.msra.mxu0 %v1168
        %1359 = vmatprep.subr.bf16.mxu0 %v1165
        %1360 = vmatpush2.bf16.msra.mxu0 %v1164
        %1361 = vmatprep.subr.bf16.mxu0 %v1161
        %1362 = vmatpush2.bf16.msra.mxu0 %v1160
        %1363 = vmatprep.subr.bf16.mxu0 %v1157
        %1364 = vmatpush2.bf16.msra.mxu0 %v1156
        %1365 = vmatprep.subr.bf16.mxu0 %v1153
        %1366 = vmatpush2.bf16.msra.mxu0 %v1152
        %1367 = vmatprep.subr.bf16.mxu0 %v1149
        %1368 = vmatpush2.bf16.msra.mxu0 %v1148
        %1369 = vmatprep.subr.bf16.mxu0 %v1145
        %1370 = vmatpush2.bf16.msra.mxu0 %v1144
        %1371 = vmatprep.subr.bf16.mxu0 %v1141
        %1372 = vmatpush2.bf16.msra.mxu0 %v1140
        %1373 = vmatprep.mubr.bf16.mxu0 %v500
        %1374 = vmatmul.mubr.bf16.gmra.mxu0 %v499
        %v1375 = vpop.f32.mrf.mxu0
        %v1376 = vadd.f32 %v1335, %v1375
        %v1377 = vpop.f32.mrf.mxu0
        %v1378 = vadd.f32 %v1337, %v1377
        %v1379 = vpop.f32.mrf.mxu0
        %v1380 = vpop.f32.mrf.mxu0
        %1381 = vdwg.mxu0
        %1382 = vmatprep.subr.bf16.mxu0 %v1075
        %1383 = vmatpush1.bf16.msra.mxu0 %v1074
        %1384 = vmatprep.subr.bf16.mxu0 %v1071
        %1385 = vmatpush1.bf16.msra.mxu0 %v1070
        %1386 = vmatprep.subr.bf16.mxu0 %v1067
        %1387 = vmatpush1.bf16.msra.mxu0 %v1066
        %1388 = vmatprep.subr.bf16.mxu0 %v1063
        %1389 = vmatpush1.bf16.msra.mxu0 %v1062
        %1390 = vmatprep.subr.bf16.mxu0 %v1059
        %1391 = vmatpush1.bf16.msra.mxu0 %v1058
        %1392 = vmatprep.subr.bf16.mxu0 %v1055
        %1393 = vmatpush1.bf16.msra.mxu0 %v1054
        %1394 = vmatprep.subr.bf16.mxu0 %v1051
        %1395 = vmatpush1.bf16.msra.mxu0 %v1050
        %1396 = vmatprep.subr.bf16.mxu0 %v1047
        %1397 = vmatpush1.bf16.msra.mxu0 %v1046
        %1398 = vmatprep.subr.bf16.mxu0 %v1107
        %1399 = vmatpush2.bf16.msra.mxu0 %v1106
        %1400 = vmatprep.subr.bf16.mxu0 %v1103
        %1401 = vmatpush2.bf16.msra.mxu0 %v1102
        %1402 = vmatprep.subr.bf16.mxu0 %v1099
        %1403 = vmatpush2.bf16.msra.mxu0 %v1098
        %1404 = vmatprep.subr.bf16.mxu0 %v1095
        %1405 = vmatpush2.bf16.msra.mxu0 %v1094
        %1406 = vmatprep.subr.bf16.mxu0 %v1091
        %1407 = vmatpush2.bf16.msra.mxu0 %v1090
        %1408 = vmatprep.subr.bf16.mxu0 %v1087
        %1409 = vmatpush2.bf16.msra.mxu0 %v1086
        %1410 = vmatprep.subr.bf16.mxu0 %v1083
        %1411 = vmatpush2.bf16.msra.mxu0 %v1082
        %1412 = vmatprep.subr.bf16.mxu0 %v1079
        %1413 = vmatpush2.bf16.msra.mxu0 %v1078
        %1414 = vmatprep.mubr.bf16.mxu0 %v498
        %1415 = vmatmul.mubr.bf16.gmra.mxu0 %v497
        %v1416 = vpop.f32.mrf.mxu0
        %v1417 = vadd.f32 %v651, %v1416
        %v1418 = vpop.f32.mrf.mxu0
        %v1419 = vadd.f32 %v655, %v1418
        %v1420 = vpop.f32.mrf.mxu0
        %v1421 = vpop.f32.mrf.mxu0
        %1422 = vdwg.mxu0
        %1423 = vmatprep.subr.bf16.mxu0 %v1139
        %1424 = vmatpush1.bf16.msra.mxu0 %v1138
        %1425 = vmatprep.subr.bf16.mxu0 %v1135
        %1426 = vmatpush1.bf16.msra.mxu0 %v1134
        %1427 = vmatprep.subr.bf16.mxu0 %v1131
        %1428 = vmatpush1.bf16.msra.mxu0 %v1130
        %1429 = vmatprep.subr.bf16.mxu0 %v1127
        %1430 = vmatpush1.bf16.msra.mxu0 %v1126
        %1431 = vmatprep.subr.bf16.mxu0 %v1123
        %1432 = vmatpush1.bf16.msra.mxu0 %v1122
        %1433 = vmatprep.subr.bf16.mxu0 %v1119
        %1434 = vmatpush1.bf16.msra.mxu0 %v1118
        %1435 = vmatprep.subr.bf16.mxu0 %v1115
        %1436 = vmatpush1.bf16.msra.mxu0 %v1114
        %1437 = vmatprep.subr.bf16.mxu0 %v1111
        %1438 = vmatpush1.bf16.msra.mxu0 %v1110
        %1439 = vmatprep.subr.bf16.mxu0 %v1171
        %1440 = vmatpush2.bf16.msra.mxu0 %v1170
        %1441 = vmatprep.subr.bf16.mxu0 %v1167
        %1442 = vmatpush2.bf16.msra.mxu0 %v1166
        %1443 = vmatprep.subr.bf16.mxu0 %v1163
        %1444 = vmatpush2.bf16.msra.mxu0 %v1162
        %1445 = vmatprep.subr.bf16.mxu0 %v1159
        %1446 = vmatpush2.bf16.msra.mxu0 %v1158
        %1447 = vmatprep.subr.bf16.mxu0 %v1155
        %1448 = vmatpush2.bf16.msra.mxu0 %v1154
        %1449 = vmatprep.subr.bf16.mxu0 %v1151
        %1450 = vmatpush2.bf16.msra.mxu0 %v1150
        %1451 = vmatprep.subr.bf16.mxu0 %v1147
        %1452 = vmatpush2.bf16.msra.mxu0 %v1146
        %1453 = vmatprep.subr.bf16.mxu0 %v1143
        %1454 = vmatpush2.bf16.msra.mxu0 %v1142
        %1455 = vmatprep.mubr.bf16.mxu0 %v500
        %1456 = vmatmul.mubr.bf16.gmra.mxu0 %v499
        %v1457 = vpop.f32.mrf.mxu0
        %v1458 = vadd.f32 %v1417, %v1457
        %v1459 = vpop.f32.mrf.mxu0
        %v1460 = vadd.f32 %v1419, %v1459
        %v1461 = vpop.f32.mrf.mxu0
        %v1462 = vpop.f32.mrf.mxu0
        %1463 = vdwg.mxu0
        %v1464 = vmax.f32 %v1376, 0.0
        %v1465 = vmax.f32 %v1378, 0.0
        %v1466 = vmax.f32 %v1458, 0.0
        %v1467 = vmax.f32 %v1460, 0.0
        %1468 = vst [vmem:[#allocation2] sm:$0xff] %v1464
        %1469 = vst [vmem:[#allocation2 + $0x8] sm:$0xff] %v1465
        %1470 = vst [vmem:[#allocation2 + $0x10] sm:$0xff] %v1466
        %1471 = vst [vmem:[#allocation2 + $0x18] sm:$0xff] %v1467
        %p1472 = scmp.eq.s32.totalorder %s21, 6
        // Predicated region
        $region73: #{tpu_custom_call.1} parent=43 // pred_check
          %p1473 = pneg %p1472
        $region74: #{tpu_custom_call.1} parent=43 // pred_check_branch
          %1475 = sbr.rel (%p1473) target = $region76
        $region75: #{tpu_custom_call.1} parent=43 // pred_region
          %v1476 = vld [vmem:[#allocation2] sm:$0xff]
          %v1477 = vld [vmem:[#allocation2 + $0x8] sm:$0xff]
          %v1478 = vld [vmem:[#allocation2 + $0x10] sm:$0xff]
          %v1479 = vld [vmem:[#allocation2 + $0x18] sm:$0xff]
          %v1480 = vpack.c.bf16 %v1476, %v1476
          %v1481 = vpack.c.bf16 %v1477, %v1477
          %v1482 = vpack.c.bf16 %v1478, %v1478
          %v1483 = vpack.c.bf16 %v1479, %v1479
          %v1484 = vld [vmem:[#allocation9] sm:$0xf]
          %v1485 = vld [vmem:[#allocation9 + $0x4] sm:$0xf]
          %v1486 = vld [vmem:[#allocation9 + $0x8] sm:$0xf]
          %v1487 = vld [vmem:[#allocation9 + $0xc] sm:$0xf]
          %v1488 = vld [vmem:[#allocation9 + $0x10] sm:$0xf]
          %v1489 = vld [vmem:[#allocation9 + $0x14] sm:$0xf]
          %v1490 = vld [vmem:[#allocation9 + $0x18] sm:$0xf]
          %v1491 = vld [vmem:[#allocation9 + $0x1c] sm:$0xf]
          %v1492 = vld [vmem:[#allocation9 + $0x20] sm:$0xf]
          %v1493 = vld [vmem:[#allocation9 + $0x24] sm:$0xf]
          %v1494 = vld [vmem:[#allocation9 + $0x28] sm:$0xf]
          %v1495 = vld [vmem:[#allocation9 + $0x2c] sm:$0xf]
          %v1496 = vld [vmem:[#allocation9 + $0x30] sm:$0xf]
          %v1497 = vld [vmem:[#allocation9 + $0x34] sm:$0xf]
          %v1498 = vld [vmem:[#allocation9 + $0x38] sm:$0xf]
          %v1499 = vld [vmem:[#allocation9 + $0x3c] sm:$0xf]
          %v1500 = vld [vmem:[#allocation9 + $0x40] sm:$0xf]
          %v1501 = vld [vmem:[#allocation9 + $0x44] sm:$0xf]
          %v1502 = vld [vmem:[#allocation9 + $0x48] sm:$0xf]
          %v1503 = vld [vmem:[#allocation9 + $0x4c] sm:$0xf]
          %v1504 = vld [vmem:[#allocation9 + $0x50] sm:$0xf]
          %v1505 = vld [vmem:[#allocation9 + $0x54] sm:$0xf]
          %v1506 = vld [vmem:[#allocation9 + $0x58] sm:$0xf]
          %v1507 = vld [vmem:[#allocation9 + $0x5c] sm:$0xf]
          %v1508 = vld [vmem:[#allocation9 + $0x60] sm:$0xf]
          %v1509 = vld [vmem:[#allocation9 + $0x64] sm:$0xf]
          %v1510 = vld [vmem:[#allocation9 + $0x68] sm:$0xf]
          %v1511 = vld [vmem:[#allocation9 + $0x6c] sm:$0xf]
          %v1512 = vld [vmem:[#allocation9 + $0x70] sm:$0xf]
          %v1513 = vld [vmem:[#allocation9 + $0x74] sm:$0xf]
          %v1514 = vld [vmem:[#allocation9 + $0x78] sm:$0xf]
          %v1515 = vld [vmem:[#allocation9 + $0x7c] sm:$0xf]
          %v1516 = vld [vmem:[#allocation9 + $0x80] sm:$0xf]
          %v1517 = vld [vmem:[#allocation9 + $0x84] sm:$0xf]
          %v1518 = vld [vmem:[#allocation9 + $0x88] sm:$0xf]
          %v1519 = vld [vmem:[#allocation9 + $0x8c] sm:$0xf]
          %v1520 = vld [vmem:[#allocation9 + $0x90] sm:$0xf]
          %v1521 = vld [vmem:[#allocation9 + $0x94] sm:$0xf]
          %v1522 = vld [vmem:[#allocation9 + $0x98] sm:$0xf]
          %v1523 = vld [vmem:[#allocation9 + $0x9c] sm:$0xf]
          %v1524 = vld [vmem:[#allocation9 + $0xa0] sm:$0xf]
          %v1525 = vld [vmem:[#allocation9 + $0xa4] sm:$0xf]
          %v1526 = vld [vmem:[#allocation9 + $0xa8] sm:$0xf]
          %v1527 = vld [vmem:[#allocation9 + $0xac] sm:$0xf]
          %v1528 = vld [vmem:[#allocation9 + $0xb0] sm:$0xf]
          %v1529 = vld [vmem:[#allocation9 + $0xb4] sm:$0xf]
          %v1530 = vld [vmem:[#allocation9 + $0xb8] sm:$0xf]
          %v1531 = vld [vmem:[#allocation9 + $0xbc] sm:$0xf]
          %v1532 = vld [vmem:[#allocation9 + $0xc0] sm:$0xf]
          %v1533 = vld [vmem:[#allocation9 + $0xc4] sm:$0xf]
          %v1534 = vld [vmem:[#allocation9 + $0xc8] sm:$0xf]
          %v1535 = vld [vmem:[#allocation9 + $0xcc] sm:$0xf]
          %v1536 = vld [vmem:[#allocation9 + $0xd0] sm:$0xf]
          %v1537 = vld [vmem:[#allocation9 + $0xd4] sm:$0xf]
          %v1538 = vld [vmem:[#allocation9 + $0xd8] sm:$0xf]
          %v1539 = vld [vmem:[#allocation9 + $0xdc] sm:$0xf]
          %v1540 = vld [vmem:[#allocation9 + $0xe0] sm:$0xf]
          %v1541 = vld [vmem:[#allocation9 + $0xe4] sm:$0xf]
          %v1542 = vld [vmem:[#allocation9 + $0xe8] sm:$0xf]
          %v1543 = vld [vmem:[#allocation9 + $0xec] sm:$0xf]
          %v1544 = vld [vmem:[#allocation9 + $0xf0] sm:$0xf]
          %v1545 = vld [vmem:[#allocation9 + $0xf4] sm:$0xf]
          %v1546 = vld [vmem:[#allocation9 + $0xf8] sm:$0xf]
          %v1547 = vld [vmem:[#allocation9 + $0xfc] sm:$0xf]
          %v1548 = vld [vmem:[#allocation12] sm:$0x1]
          %v1550 = vlaneseq
          %v1551 = vshrl.u32 %v1550, 7
          %v1552 = vsub.s32 0, %v1551
          %v1553 = vrot.slane %v1548, %v1552
          %v1619 = vunpack.c.l.b16 %v1484
          %v1620 = vunpack.c.l.b16 %v1485
          %v1621 = vunpack.c.l.b16 %v1486
          %v1622 = vunpack.c.l.b16 %v1487
          %v1623 = vunpack.c.l.b16 %v1488
          %v1624 = vunpack.c.l.b16 %v1489
          %v1625 = vunpack.c.l.b16 %v1490
          %v1626 = vunpack.c.l.b16 %v1491
          %v1627 = vunpack.c.l.b16 %v1492
          %v1628 = vunpack.c.l.b16 %v1493
          %v1629 = vunpack.c.l.b16 %v1494
          %v1630 = vunpack.c.l.b16 %v1495
          %v1631 = vunpack.c.l.b16 %v1496
          %v1632 = vunpack.c.l.b16 %v1497
          %v1633 = vunpack.c.l.b16 %v1498
          %v1634 = vunpack.c.l.b16 %v1499
          %v1635 = vunpack.c.l.b16 %v1500
          %v1636 = vunpack.c.l.b16 %v1501
          %v1637 = vunpack.c.l.b16 %v1502
          %v1638 = vunpack.c.l.b16 %v1503
          %v1639 = vunpack.c.l.b16 %v1504
          %v1640 = vunpack.c.l.b16 %v1505
          %v1641 = vunpack.c.l.b16 %v1506
          %v1642 = vunpack.c.l.b16 %v1507
          %v1643 = vunpack.c.l.b16 %v1508
          %v1644 = vunpack.c.l.b16 %v1509
          %v1645 = vunpack.c.l.b16 %v1510
          %v1646 = vunpack.c.l.b16 %v1511
          %v1647 = vunpack.c.l.b16 %v1512
          %v1648 = vunpack.c.l.b16 %v1513
          %v1649 = vunpack.c.l.b16 %v1514
          %v1650 = vunpack.c.l.b16 %v1515
          %v1651 = vunpack.c.l.b16 %v1516
          %v1652 = vunpack.c.l.b16 %v1517
          %v1653 = vunpack.c.l.b16 %v1518
          %v1654 = vunpack.c.l.b16 %v1519
          %v1655 = vunpack.c.l.b16 %v1520
          %v1656 = vunpack.c.l.b16 %v1521
          %v1657 = vunpack.c.l.b16 %v1522
          %v1658 = vunpack.c.l.b16 %v1523
          %v1659 = vunpack.c.l.b16 %v1524
          %v1660 = vunpack.c.l.b16 %v1525
          %v1661 = vunpack.c.l.b16 %v1526
          %v1662 = vunpack.c.l.b16 %v1527
          %v1663 = vunpack.c.l.b16 %v1528
          %v1664 = vunpack.c.l.b16 %v1529
          %v1665 = vunpack.c.l.b16 %v1530
          %v1666 = vunpack.c.l.b16 %v1531
          %v1667 = vunpack.c.l.b16 %v1532
          %v1668 = vunpack.c.l.b16 %v1533
          %v1669 = vunpack.c.l.b16 %v1534
          %v1670 = vunpack.c.l.b16 %v1535
          %v1671 = vunpack.c.l.b16 %v1536
          %v1672 = vunpack.c.l.b16 %v1537
          %v1673 = vunpack.c.l.b16 %v1538
          %v1674 = vunpack.c.l.b16 %v1539
          %v1675 = vunpack.c.l.b16 %v1540
          %v1676 = vunpack.c.l.b16 %v1541
          %v1677 = vunpack.c.l.b16 %v1542
          %v1678 = vunpack.c.l.b16 %v1543
          %v1679 = vunpack.c.l.b16 %v1544
          %v1680 = vunpack.c.l.b16 %v1545
          %v1681 = vunpack.c.l.b16 %v1546
          %v1682 = vunpack.c.l.b16 %v1547
          %v1683 = vpack.c.b16 %v1620, %v1619
          %v1684 = vpack.c.b16 %v1622, %v1621
          %v1685 = vpack.c.b16 %v1624, %v1623
          %v1686 = vpack.c.b16 %v1626, %v1625
          %v1687 = vpack.c.b16 %v1628, %v1627
          %v1688 = vpack.c.b16 %v1630, %v1629
          %v1689 = vpack.c.b16 %v1632, %v1631
          %v1690 = vpack.c.b16 %v1634, %v1633
          %v1691 = vpack.c.b16 %v1636, %v1635
          %v1692 = vpack.c.b16 %v1638, %v1637
          %v1693 = vpack.c.b16 %v1640, %v1639
          %v1694 = vpack.c.b16 %v1642, %v1641
          %v1695 = vpack.c.b16 %v1644, %v1643
          %v1696 = vpack.c.b16 %v1646, %v1645
          %v1697 = vpack.c.b16 %v1648, %v1647
          %v1698 = vpack.c.b16 %v1650, %v1649
          %v1699 = vpack.c.b16 %v1652, %v1651
          %v1700 = vpack.c.b16 %v1654, %v1653
          %v1701 = vpack.c.b16 %v1656, %v1655
          %v1702 = vpack.c.b16 %v1658, %v1657
          %v1703 = vpack.c.b16 %v1660, %v1659
          %v1704 = vpack.c.b16 %v1662, %v1661
          %v1705 = vpack.c.b16 %v1664, %v1663
          %v1706 = vpack.c.b16 %v1666, %v1665
          %v1707 = vpack.c.b16 %v1668, %v1667
          %v1708 = vpack.c.b16 %v1670, %v1669
          %v1709 = vpack.c.b16 %v1672, %v1671
          %v1710 = vpack.c.b16 %v1674, %v1673
          %v1711 = vpack.c.b16 %v1676, %v1675
          %v1712 = vpack.c.b16 %v1678, %v1677
          %v1713 = vpack.c.b16 %v1680, %v1679
          %v1714 = vpack.c.b16 %v1682, %v1681
          %1747 = vmatprep.subr.bf16.mxu0 0
          %1748 = vmatpush1.bf16.msra.mxu0 %v1690
          %1749 = vmatprep.subr.bf16.mxu0 0
          %1750 = vmatpush1.bf16.msra.mxu0 %v1689
          %1751 = vmatprep.subr.bf16.mxu0 0
          %1752 = vmatpush1.bf16.msra.mxu0 %v1688
          %1753 = vmatprep.subr.bf16.mxu0 0
          %1754 = vmatpush1.bf16.msra.mxu0 %v1687
          %1755 = vmatprep.subr.bf16.mxu0 0
          %1756 = vmatpush1.bf16.msra.mxu0 %v1686
          %1757 = vmatprep.subr.bf16.mxu0 0
          %1758 = vmatpush1.bf16.msra.mxu0 %v1685
          %1759 = vmatprep.subr.bf16.mxu0 0
          %1760 = vmatpush1.bf16.msra.mxu0 %v1684
          %1761 = vmatprep.subr.bf16.mxu0 0
          %1762 = vmatpush1.bf16.msra.mxu0 %v1683
          %1763 = vmatprep.subr.bf16.mxu0 0
          %1764 = vmatpush2.bf16.msra.mxu0 %v1698
          %1765 = vmatprep.subr.bf16.mxu0 0
          %1766 = vmatpush2.bf16.msra.mxu0 %v1697
          %1767 = vmatprep.subr.bf16.mxu0 0
          %1768 = vmatpush2.bf16.msra.mxu0 %v1696
          %1769 = vmatprep.subr.bf16.mxu0 0
          %1770 = vmatpush2.bf16.msra.mxu0 %v1695
          %1771 = vmatprep.subr.bf16.mxu0 0
          %1772 = vmatpush2.bf16.msra.mxu0 %v1694
          %1773 = vmatprep.subr.bf16.mxu0 0
          %1774 = vmatpush2.bf16.msra.mxu0 %v1693
          %1775 = vmatprep.subr.bf16.mxu0 0
          %1776 = vmatpush2.bf16.msra.mxu0 %v1692
          %1777 = vmatprep.subr.bf16.mxu0 0
          %1778 = vmatpush2.bf16.msra.mxu0 %v1691
          %1779 = vmatprep.mubr.bf16.mxu0 %v1481
          %1780 = vmatmul.mubr.bf16.gmra.mxu0 %v1480
          %v1781 = vpop.f32.mrf.mxu0
          %v1782 = vadd.f32 %v1553, %v1781
          %v1783 = vpop.f32.mrf.mxu0
          %v1784 = vpop.f32.mrf.mxu0
          %v1785 = vpop.f32.mrf.mxu0
          %1786 = vdwg.mxu0
          %1787 = vmatprep.subr.bf16.mxu0 0
          %1788 = vmatpush1.bf16.msra.mxu0 %v1706
          %1789 = vmatprep.subr.bf16.mxu0 0
          %1790 = vmatpush1.bf16.msra.mxu0 %v1705
          %1791 = vmatprep.subr.bf16.mxu0 0
          %1792 = vmatpush1.bf16.msra.mxu0 %v1704
          %1793 = vmatprep.subr.bf16.mxu0 0
          %1794 = vmatpush1.bf16.msra.mxu0 %v1703
          %1795 = vmatprep.subr.bf16.mxu0 0
          %1796 = vmatpush1.bf16.msra.mxu0 %v1702
          %1797 = vmatprep.subr.bf16.mxu0 0
          %1798 = vmatpush1.bf16.msra.mxu0 %v1701
          %1799 = vmatprep.subr.bf16.mxu0 0
          %1800 = vmatpush1.bf16.msra.mxu0 %v1700
          %1801 = vmatprep.subr.bf16.mxu0 0
          %1802 = vmatpush1.bf16.msra.mxu0 %v1699
          %1803 = vmatprep.subr.bf16.mxu0 0
          %1804 = vmatpush2.bf16.msra.mxu0 %v1714
          %1805 = vmatprep.subr.bf16.mxu0 0
          %1806 = vmatpush2.bf16.msra.mxu0 %v1713
          %1807 = vmatprep.subr.bf16.mxu0 0
          %1808 = vmatpush2.bf16.msra.mxu0 %v1712
          %1809 = vmatprep.subr.bf16.mxu0 0
          %1810 = vmatpush2.bf16.msra.mxu0 %v1711
          %1811 = vmatprep.subr.bf16.mxu0 0
          %1812 = vmatpush2.bf16.msra.mxu0 %v1710
          %1813 = vmatprep.subr.bf16.mxu0 0
          %1814 = vmatpush2.bf16.msra.mxu0 %v1709
          %1815 = vmatprep.subr.bf16.mxu0 0
          %1816 = vmatpush2.bf16.msra.mxu0 %v1708
          %1817 = vmatprep.subr.bf16.mxu0 0
          %1818 = vmatpush2.bf16.msra.mxu0 %v1707
          %1819 = vmatprep.mubr.bf16.mxu0 %v1483
          %1820 = vmatmul.mubr.bf16.gmra.mxu0 %v1482
          %v1821 = vpop.f32.mrf.mxu0
          %v1822 = vadd.f32 %v1782, %v1821
          %v1823 = vpop.f32.mrf.mxu0
          %v1824 = vpop.f32.mrf.mxu0
          %v1825 = vpop.f32.mrf.mxu0
          %1826 = vdwg.mxu0
          %1827 = vst [vmem:[#allocation13] sm:$0xff] %v1822
        $region76: #{tpu_custom_call.1} parent=43 // pred_fallthru
          _
        // Predicated region
        $region77: #{tpu_custom_call.1} parent=43 // pred_check
          %p1828 = pneg %p165
        $region78: #{tpu_custom_call.1} parent=43 // pred_check_branch
          %1830 = sbr.rel (%p1828) target = $region80
        $region79: #{tpu_custom_call.1} parent=43 // pred_region
          %s1832 = ssub.s32 128, 128
          %1833 = vsyncadd [#allocation5], %s1832
          %s1835 = sshll.u32 [#allocation13], 4
          %s1836 = int_to_ptr.vmem [resolvable:$true] %s1835
          %1838 = dma.vmem_to_hbm [thread:$0]  %s1836, 128, %s6, [#allocation5]
        $region80: #{tpu_custom_call.1} parent=43 // pred_fallthru
          _
        // Predicated region
        $region81: #{tpu_custom_call.1} parent=43 // pred_check
          %p1839 = pneg %p165
        $region82: #{tpu_custom_call.1} parent=43 // pred_check_branch
          %1841 = sbr.rel (%p1839) target = $region84
        $region83: #{tpu_custom_call.1} parent=43 // pred_region
          %1842 = dma.done [#allocation5], 128
        $region84: #{tpu_custom_call.1} parent=43 // pred_fallthru
          _
      $region44: #{tpu_custom_call.1} parent=5 // pred_fallthru
        _
      %p1843 = scmp.le.s32.totalorder 2, %s16
      // Predicated region
      $region85: #{tpu_custom_call.1} parent=5 // pred_check
        %p1844 = pneg %p1843
      $region86: #{tpu_custom_call.1} parent=5 // pred_check_branch
        %1846 = sbr.rel (%p1844) target = $region88
      $region87: #{tpu_custom_call.1} parent=5 // pred_region
        %s1847 = ssub.s32 %s16, 2
      $region88: #{tpu_custom_call.1} parent=5 // pred_fallthru
        _
    $region6: #{tpu_custom_call.1} parent=1 // loop_footer
      %s20 = sadd.s32 1, %s16
    $region7: #{tpu_custom_call.1} parent=1 // loop_footer_branch
      %15 = sbr.rel target = $region3
    $region8: #{tpu_custom_call.1} parent=1 // loop_exit
      _
    %1848 = vsyncpa [#allocation4], 1
    %s1849 = scalar_lea.sflag [#allocation4], 1
    %1850 = vsyncpa %s1849, 1
    %1851 = vsyncpa [#allocation7], 1
    %1852 = vsyncpa [#allocation11], 1
    %1853 = vsyncpa [#allocation5], 1
    %s1854 = scalar_lea.sflag [#allocation5], 1
    %1855 = vsyncpa %s1854, 1

</llo_original>
